<compile_context>
chip_gen: v6e
topology: v6e:2x2x1
jax: 0.10.0
libtpu: 0.0.40
codegen_flags: <defaults>
</compile_context>

<pallas_src>
import functools

import jax
import jax.numpy as jnp
from jax.experimental import pallas as pl
from jax.experimental.pallas import tpu as pltpu

LN_EPS = 1e-5
_INV_SQRT2 = 0.7071067811865476


def _largest_divisor_at_most(n, cap):
    cap = int(max(1, min(n, cap)))
    for c in range(cap, 0, -1):
        if n % c == 0:
            return c
    return 1


# ------------------ Kernel 1: LayerNorm + GELU + x @ W_ih (both dirs) ------------------ #
def _ln_gelu_proj_kernel(x_ref, g_ref, b_ref, w_ref, bias_ref, gi_ref, *, hidden):
    x = x_ref[...].astype(jnp.float32)                               # (Tt, B, D)
    mean = jnp.mean(x, axis=-1, keepdims=True)
    var = jnp.mean(jnp.square(x - mean), axis=-1, keepdims=True)     # biased var (torch LN)
    y = (x - mean) * jax.lax.rsqrt(var + LN_EPS)
    y = y * g_ref[...] + b_ref[...]
    # exact (erf-based) GELU, matching torch.nn.functional.gelu default
    y = 0.5 * y * (1.0 + jax.lax.erf(y * jnp.float32(_INV_SQRT2)))

    tt, bsz, d = x.shape
    rows = y.reshape(tt * bsz, d).astype(w_ref.dtype)                # time-major rows
    # One big MXU matmul covering both directions / all three gates: (Tt*B, 6H).
    gi = jnp.dot(rows, w_ref[...], preferred_element_type=jnp.float32) + bias_ref[...]
    gi = gi.reshape(tt, bsz, 6 * hidden)

    # Split per (direction, gate) once per chunk (amortized; never per timestep).
    for di in range(2):
        for gt in range(3):
            c0 = (3 * di + gt) * hidden
            gi_ref[di, gt] = gi[:, :, c0:c0 + hidden].astype(gi_ref.dtype)


def _ln_gelu_proj(x_tm, gamma, beta, w_ih, b_ih, hidden, gi_dtype):
    T, B, D = x_tm.shape
    H6 = w_ih.shape[1]
    # VMEM-bounded time chunk.  All blocks keep trailing dims == full array dims,
    # so any divisor of T is a legal chunk.
    bytes_per_t = B * (2 * D * 4 + H6 * 4 + H6 * 2 + D * 2)
    tt = _largest_divisor_at_most(T, (8 << 20) // max(1, bytes_per_t))
    kernel = functools.partial(_ln_gelu_proj_kernel, hidden=hidden)
    return pl.pallas_call(
        kernel,
        out_shape=jax.ShapeDtypeStruct((2, 3, T, B, hidden), gi_dtype),
        grid=(T // tt,),
        in_specs=[
            pl.BlockSpec((tt, B, D), lambda i: (i, 0, 0)),
            pl.BlockSpec((1, D), lambda i: (0, 0)),
            pl.BlockSpec((1, D), lambda i: (0, 0)),
            pl.BlockSpec((D, H6), lambda i: (0, 0)),
            pl.BlockSpec((1, H6), lambda i: (0, 0)),
        ],
        out_specs=pl.BlockSpec((2, 3, tt, B, hidden), lambda i: (0, 0, i, 0, 0)),
        compiler_params=pltpu.CompilerParams(dimension_semantics=("parallel",)),
    )(x_tm, gamma, beta, w_ih, b_ih)


# ---------------------- Kernel 2: fused bidirectional GRU recurrence ------------------- #
def _gru_chunk_kernel(gi_ref, whh_ref, bhh_ref, out_ref, h_ref, *, hidden, chunk):
    d = pl.program_id(0)  # 0 = forward, 1 = backward

    @pl.when(pl.program_id(1) == 0)
    def _():
        h_ref[...] = jnp.zeros_like(h_ref)  # nn.GRU default h0 = 0

    whh = whh_ref[0]                         # (H, 3H), compute dtype, loaded once/chunk
    bhh = bhh_ref[0].astype(jnp.float32)     # (1, 3H)
    H = hidden

    def step(i, h):
        # Local timestep inside the chunk: ascending for fwd, descending for bwd.
        li = i + d * (chunk - 1 - 2 * i)
        gi_r = gi_ref[0, 0, li].astype(jnp.float32)     # (B, H)
        gi_z = gi_ref[0, 1, li].astype(jnp.float32)
        gi_n = gi_ref[0, 2, li].astype(jnp.float32)
        gh = jnp.dot(h.astype(whh.dtype), whh,
                     preferred_element_type=jnp.float32) + bhh      # (B, 3H)
        r = jax.nn.sigmoid(gi_r + gh[:, :H])
        z = jax.nn.sigmoid(gi_z + gh[:, H:2 * H])
        n = jnp.tanh(gi_n + r * gh[:, 2 * H:])
        h_new = (1.0 - z) * n + z * h
        out_ref[0, li] = h_new.astype(out_ref.dtype)
        return h_new

    h_last = jax.lax.fori_loop(0, chunk, step, h_ref[...],
                               unroll=True if chunk <= 8 else False)
    h_ref[...] = h_last  # carry hidden state to the next chunk of this direction


def _bigru_recurrence(gi, w_hh, b_hh, out_dtype):
    _, _, T, B, H = gi.shape
    gi_bytes = jnp.dtype(gi.dtype).itemsize
    bytes_per_t = B * H * (2 * 3 * gi_bytes + 2 * 4)
    tc = _largest_divisor_at_most(T, (6 << 20) // max(1, bytes_per_t))
    n_chunks = T // tc

    def time_block(d, c):
        # forward sweeps chunks 0..n-1; backward sweeps n-1..0
        return c + d * (n_chunks - 1 - 2 * c)

    kernel = functools.partial(_gru_chunk_kernel, hidden=H, chunk=tc)
    return pl.pallas_call(
        kernel,
        out_shape=jax.ShapeDtypeStruct((2, T, B, H), out_dtype),
        grid=(2, n_chunks),
        in_specs=[
            pl.BlockSpec((1, 3, tc, B, H), lambda d, c: (d, 0, time_block(d, c), 0, 0)),
            pl.BlockSpec((1, H, 3 * H), lambda d, c: (d, 0, 0)),
            pl.BlockSpec((1, 1, 3 * H), lambda d, c: (d, 0, 0)),
        ],
        out_specs=pl.BlockSpec((1, tc, B, H), lambda d, c: (d, time_block(d, c), 0, 0)),
        scratch_shapes=[pltpu.VMEM((B, H), jnp.float32)],
        compiler_params=pltpu.CompilerParams(
            # direction axis is independent ("parallel": one TC per direction on
            # multi-core parts); the time-chunk axis is the sequential recurrence.
            dimension_semantics=("parallel", "arbitrary")),
    )(gi, w_hh, b_hh)


# ------------------------------------ Module forward ----------------------------------- #
def bidirectional_gru_forward(x, params, *, compute_dtype=jnp.bfloat16):
    """x: (B, T, rnn_dim) -> (B, T, 2*hidden_size)   (batch_first, like nn.GRU)."""
    B, T, D = x.shape
    H = params["w_hh_f"].shape[1]

    # Pad batch to a multiple of 8 sublanes: keeps in-kernel reshapes tile-aligned
    # and gives the recurrent (B,H)@(H,3H) matmul full sublanes on the MXU.
    Bp = ((B + 7) // 8) * 8
    if Bp != B:
        x = jnp.pad(x, ((0, Bp - B), (0, 0), (0, 0)))
    # TODO(synk): this time-major relayout costs one HBM pass over x; a fully
    # transpose-free batch-first path needs hidden_size % 128 == 0 for lane-aligned writes.
    x_tm = jnp.transpose(x, (1, 0, 2))  # (T, Bp, D)

    # Stacked / transposed weights, prepared once outside the kernels.
    w_ih = jnp.concatenate([params["w_ih_f"].T, params["w_ih_b"].T], axis=1)
    w_ih = w_ih.astype(compute_dtype)                                    # (D, 6H)
    b_ih = jnp.concatenate([params["b_ih_f"], params["b_ih_b"]])
    b_ih = b_ih.reshape(1, 6 * H).astype(jnp.float32)
    w_hh = jnp.stack([params["w_hh_f"].T, params["w_hh_b"].T]).astype(compute_dtype)  # (2,H,3H)
    b_hh = jnp.stack([params["b_hh_f"], params["b_hh_b"]]).reshape(2, 1, 3 * H)
    b_hh = b_hh.astype(jnp.float32)
    gamma = params["ln_gamma"].reshape(1, D).astype(jnp.float32)
    beta = params["ln_beta"].reshape(1, D).astype(jnp.float32)

    gi = _ln_gelu_proj(x_tm, gamma, beta, w_ih, b_ih, H, compute_dtype)  # (2,3,T,Bp,H)
    out2 = _bigru_recurrence(gi, w_hh, b_hh, x.dtype)                    # (2,T,Bp,H)

    # (2,T,Bp,H) -> (Bp,T,2H): forward states in [..., :H], backward in [..., H:]
    out = jnp.transpose(out2, (2, 1, 0, 3)).reshape(Bp, T, 2 * H)
    # TODO(synk): nn.Dropout is training-only randomness; identity here (eval-mode forward).
    return out[:B]


def init_params(key, rnn_dim, hidden_size):
    """Deterministic init matching the PyTorch module's parameter shapes."""
    k = 1.0 / jnp.sqrt(jnp.float32(hidden_size))
    keys = jax.random.split(key, 8)
    u = lambda kk, shape: jax.random.uniform(kk, shape, jnp.float32, -k, k)
    return {
        "ln_gamma": jnp.ones((rnn_dim,), jnp.float32),
        "ln_beta": jnp.zeros((rnn_dim,), jnp.float32),
        # forward direction
        "w_ih_f": u(keys[0], (3 * hidden_size, rnn_dim)),
        "w_hh_f": u(keys[1], (3 * hidden_size, hidden_size)),
        "b_ih_f": u(keys[2], (3 * hidden_size,)),
        "b_hh_f": u(keys[3], (3 * hidden_size,)),
        # reverse direction
        "w_ih_b": u(keys[4], (3 * hidden_size, rnn_dim)),
        "w_hh_b": u(keys[5], (3 * hidden_size, hidden_size)),
        "b_ih_b": u(keys[6], (3 * hidden_size,)),
        "b_hh_b": u(keys[7], (3 * hidden_size,)),
    }


def _reference_forward(x, params):
    """Pure-JAX reference (LN -> GELU -> bidirectional GRU), f32."""
    xf = x.astype(jnp.float32)
    mean = jnp.mean(xf, axis=-1, keepdims=True)
    var = jnp.mean(jnp.square(xf - mean), axis=-1, keepdims=True)
    y = (xf - mean) * jax.lax.rsqrt(var + LN_EPS)
    y = y * params["ln_gamma"] + params["ln_beta"]
    y = 0.5 * y * (1.0 + jax.lax.erf(y * _INV_SQRT2))

    def run(seq, w_ih, w_hh, b_ih, b_hh):
        Hv = w_hh.shape[1]

        def step(h, xt):
            gi = xt @ w_ih.T + b_ih
            gh = h @ w_hh.T + b_hh
            r = jax.nn.sigmoid(gi[:, :Hv] + gh[:, :Hv])
            z = jax.nn.sigmoid(gi[:, Hv:2 * Hv] + gh[:, Hv:2 * Hv])
            n = jnp.tanh(gi[:, 2 * Hv:] + r * gh[:, 2 * Hv:])
            h_new = (1.0 - z) * n + z * h
            return h_new, h_new

        h0 = jnp.zeros((seq.shape[0], Hv), jnp.float32)
        _, hs = jax.lax.scan(step, h0, jnp.swapaxes(seq, 0, 1))
        return jnp.swapaxes(hs, 0, 1)

    out_f = run(y, params["w_ih_f"], params["w_hh_f"], params["b_ih_f"], params["b_hh_f"])
    out_b = run(y[:, ::-1], params["w_ih_b"], params["w_hh_b"],
                params["b_ih_b"], params["b_hh_b"])[:, ::-1]
    return jnp.concatenate([out_f, out_b], axis=-1)


if __name__ == "__main__":
    B, T, RNN_DIM, HIDDEN = 2, 8, 64, 32

    root = jax.random.PRNGKey(0)
    k_x, k_p = jax.random.split(root)
    x = jax.random.normal(k_x, (B, T, RNN_DIM), jnp.float32)
    params = init_params(k_p, RNN_DIM, HIDDEN)

    out = jax.jit(bidirectional_gru_forward)(x, params)
    out = jax.block_until_ready(out)
    assert out.shape == (B, T, 2 * HIDDEN), out.shape
    assert bool(jnp.all(jnp.isfinite(out)))

    ref = _reference_forward(x, params)
    err = float(jnp.max(jnp.abs(out.astype(jnp.float32) - ref)))
    assert err < 5e-2, f"max abs error vs reference: {err}"

    print("KERNEL_OK")
</pallas_src>

<mosaic_0001>
module attributes {stable_mosaic.version = 11 : i64} {
  func.func @_ln_gelu_proj_kernel(%arg0: i32, %arg1: memref<8x8x64xf32, #tpu.memory_space<vmem>>, %arg2: memref<1x64xf32, #tpu.memory_space<vmem>>, %arg3: memref<1x64xf32, #tpu.memory_space<vmem>>, %arg4: memref<64x192xbf16, #tpu.memory_space<vmem>>, %arg5: memref<1x192xf32, #tpu.memory_space<vmem>>, %arg6: memref<2x3x8x8x32xbf16, #tpu.memory_space<vmem>>) attributes {dimension_semantics = [#tpu.dimension_semantics<parallel>], iteration_bounds = array<i64: 1>, scalar_prefetch = 0 : i64, scratch_operands = 0 : i64, tpu.core_type = #tpu.core_type<tc>, window_params = [{transform_indices = @transform_0, window_bounds = array<i64: 8, 8, 64>}, {pipeline_mode = #tpu.pipeline_mode<synchronous>, transform_indices = @transform_1, window_bounds = array<i64: 1, 64>}, {pipeline_mode = #tpu.pipeline_mode<synchronous>, transform_indices = @transform_2, window_bounds = array<i64: 1, 64>}, {pipeline_mode = #tpu.pipeline_mode<synchronous>, transform_indices = @transform_3, window_bounds = array<i64: 64, 192>}, {pipeline_mode = #tpu.pipeline_mode<synchronous>, transform_indices = @transform_4, window_bounds = array<i64: 1, 192>}, {transform_indices = @transform_5, window_bounds = array<i64: 2, 3, 8, 8, 32>}]} {
    %c0 = arith.constant 0 : index
    %c0_0 = arith.constant 0 : index
    %c0_1 = arith.constant 0 : index
    %0 = vector.load %arg1[%c0, %c0_0, %c0_1] : memref<8x8x64xf32, #tpu.memory_space<vmem>>, vector<8x8x64xf32>
    %cst = arith.constant dense<0.000000e+00> : vector<8x8xf32>
    %1 = vector.multi_reduction <add>, %0, %cst [2] : vector<8x8x64xf32> to vector<8x8xf32>
    %2 = vector.shape_cast %1 : vector<8x8xf32> to vector<8x8x1xf32>
    %cst_2 = arith.constant 6.400000e+01 : f32
    %3 = vector.broadcast %cst_2 : f32 to vector<8x8x1xf32>
    %4 = arith.divf %2, %3 : vector<8x8x1xf32>
    %5 = vector.broadcast %4 : vector<8x8x1xf32> to vector<8x8x64xf32>
    %6 = arith.subf %0, %5 : vector<8x8x64xf32>
    %7 = arith.mulf %6, %6 : vector<8x8x64xf32>
    %cst_3 = arith.constant dense<0.000000e+00> : vector<8x8xf32>
    %8 = vector.multi_reduction <add>, %7, %cst_3 [2] : vector<8x8x64xf32> to vector<8x8xf32>
    %9 = vector.shape_cast %8 : vector<8x8xf32> to vector<8x8x1xf32>
    %cst_4 = arith.constant 6.400000e+01 : f32
    %10 = vector.broadcast %cst_4 : f32 to vector<8x8x1xf32>
    %11 = arith.divf %9, %10 : vector<8x8x1xf32>
    %12 = vector.broadcast %4 : vector<8x8x1xf32> to vector<8x8x64xf32>
    %13 = arith.subf %0, %12 : vector<8x8x64xf32>
    %cst_5 = arith.constant 9.99999974E-6 : f32
    %14 = vector.broadcast %cst_5 : f32 to vector<8x8x1xf32>
    %15 = arith.addf %11, %14 : vector<8x8x1xf32>
    %16 = math.rsqrt %15 : vector<8x8x1xf32>
    %17 = vector.broadcast %16 : vector<8x8x1xf32> to vector<8x8x64xf32>
    %18 = arith.mulf %13, %17 : vector<8x8x64xf32>
    %c0_6 = arith.constant 0 : index
    %c0_7 = arith.constant 0 : index
    %19 = vector.load %arg2[%c0_6, %c0_7] : memref<1x64xf32, #tpu.memory_space<vmem>>, vector<1x64xf32>
    %20 = vector.shape_cast %19 : vector<1x64xf32> to vector<1x1x64xf32>
    %21 = vector.broadcast %20 : vector<1x1x64xf32> to vector<8x8x64xf32>
    %22 = arith.mulf %18, %21 : vector<8x8x64xf32>
    %c0_8 = arith.constant 0 : index
    %c0_9 = arith.constant 0 : index
    %23 = vector.load %arg3[%c0_8, %c0_9] : memref<1x64xf32, #tpu.memory_space<vmem>>, vector<1x64xf32>
    %24 = vector.shape_cast %23 : vector<1x64xf32> to vector<1x1x64xf32>
    %25 = vector.broadcast %24 : vector<1x1x64xf32> to vector<8x8x64xf32>
    %26 = arith.addf %22, %25 : vector<8x8x64xf32>
    %cst_10 = arith.constant 5.000000e-01 : f32
    %27 = vector.broadcast %cst_10 : f32 to vector<8x8x64xf32>
    %28 = arith.mulf %27, %26 : vector<8x8x64xf32>
    %cst_11 = arith.constant 0.707106769 : f32
    %29 = vector.broadcast %cst_11 : f32 to vector<8x8x64xf32>
    %30 = arith.mulf %26, %29 : vector<8x8x64xf32>
    %31 = math.erf %30 : vector<8x8x64xf32>
    %cst_12 = arith.constant 1.000000e+00 : f32
    %32 = vector.broadcast %cst_12 : f32 to vector<8x8x64xf32>
    %33 = arith.addf %32, %31 : vector<8x8x64xf32>
    %34 = arith.mulf %28, %33 : vector<8x8x64xf32>
    %35 = vector.shape_cast %34 : vector<8x8x64xf32> to vector<64x64xf32>
    %36 = arith.truncf %35 : vector<64x64xf32> to vector<64x64xbf16>
    %c0_13 = arith.constant 0 : index
    %c0_14 = arith.constant 0 : index
    %37 = vector.load %arg4[%c0_13, %c0_14] : memref<64x192xbf16, #tpu.memory_space<vmem>>, vector<64x192xbf16>
    %cst_15 = arith.constant dense<0.000000e+00> : vector<64x192xf32>
    %38 = tpu.matmul %36, %37, %cst_15 {dimension_numbers = #tpu.dot_dimension_numbers<[1], [0], [0], [1], [0, 0, 1, 1], [], []>} : vector<64x64xbf16>, vector<64x192xbf16>, vector<64x192xf32> -> vector<64x192xf32>
    %c0_16 = arith.constant 0 : index
    %c0_17 = arith.constant 0 : index
    %39 = vector.load %arg5[%c0_16, %c0_17] : memref<1x192xf32, #tpu.memory_space<vmem>>, vector<1x192xf32>
    %40 = vector.broadcast %39 : vector<1x192xf32> to vector<64x192xf32>
    %41 = arith.addf %38, %40 : vector<64x192xf32>
    %42 = vector.shape_cast %41 : vector<64x192xf32> to vector<8x8x192xf32>
    %43 = vector.extract_strided_slice %42 {offsets = [0, 0, 0], sizes = [8, 8, 32], strides = [1, 1, 1]} : vector<8x8x192xf32> to vector<8x8x32xf32>
    %44 = arith.truncf %43 : vector<8x8x32xf32> to vector<8x8x32xbf16>
    %c0_18 = arith.constant 0 : index
    %c0_19 = arith.constant 0 : index
    %c0_20 = arith.constant 0 : index
    %c0_21 = arith.constant 0 : index
    %c0_22 = arith.constant 0 : index
    %45 = vector.load %arg6[%c0_18, %c0_19, %c0_20, %c0_21, %c0_22] : memref<2x3x8x8x32xbf16, #tpu.memory_space<vmem>>, vector<1x1x8x8x32xbf16>
    %46 = vector.shape_cast %45 : vector<1x1x8x8x32xbf16> to vector<8x8x32xbf16>
    %47 = vector.shape_cast %44 : vector<8x8x32xbf16> to vector<1x1x8x8x32xbf16>
    tpu.vector_store %arg6[%c0_18, %c0_19, %c0_20, %c0_21, %c0_22], %47 {strides = array<i32>} : memref<2x3x8x8x32xbf16, #tpu.memory_space<vmem>>, vector<1x1x8x8x32xbf16>,
    %48 = vector.extract_strided_slice %42 {offsets = [0, 0, 32], sizes = [8, 8, 32], strides = [1, 1, 1]} : vector<8x8x192xf32> to vector<8x8x32xf32>
    %49 = arith.truncf %48 : vector<8x8x32xf32> to vector<8x8x32xbf16>
    %c0_23 = arith.constant 0 : index
    %c1 = arith.constant 1 : index
    %c0_24 = arith.constant 0 : index
    %c0_25 = arith.constant 0 : index
    %c0_26 = arith.constant 0 : index
    %50 = vector.load %arg6[%c0_23, %c1, %c0_24, %c0_25, %c0_26] : memref<2x3x8x8x32xbf16, #tpu.memory_space<vmem>>, vector<1x1x8x8x32xbf16>
    %51 = vector.shape_cast %50 : vector<1x1x8x8x32xbf16> to vector<8x8x32xbf16>
    %52 = vector.shape_cast %49 : vector<8x8x32xbf16> to vector<1x1x8x8x32xbf16>
    tpu.vector_store %arg6[%c0_23, %c1, %c0_24, %c0_25, %c0_26], %52 {strides = array<i32>} : memref<2x3x8x8x32xbf16, #tpu.memory_space<vmem>>, vector<1x1x8x8x32xbf16>,
    %53 = vector.extract_strided_slice %42 {offsets = [0, 0, 64], sizes = [8, 8, 32], strides = [1, 1, 1]} : vector<8x8x192xf32> to vector<8x8x32xf32>
    %54 = arith.truncf %53 : vector<8x8x32xf32> to vector<8x8x32xbf16>
    %c0_27 = arith.constant 0 : index
    %c2 = arith.constant 2 : index
    %c0_28 = arith.constant 0 : index
    %c0_29 = arith.constant 0 : index
    %c0_30 = arith.constant 0 : index
    %55 = vector.load %arg6[%c0_27, %c2, %c0_28, %c0_29, %c0_30] : memref<2x3x8x8x32xbf16, #tpu.memory_space<vmem>>, vector<1x1x8x8x32xbf16>
    %56 = vector.shape_cast %55 : vector<1x1x8x8x32xbf16> to vector<8x8x32xbf16>
    %57 = vector.shape_cast %54 : vector<8x8x32xbf16> to vector<1x1x8x8x32xbf16>
    tpu.vector_store %arg6[%c0_27, %c2, %c0_28, %c0_29, %c0_30], %57 {strides = array<i32>} : memref<2x3x8x8x32xbf16, #tpu.memory_space<vmem>>, vector<1x1x8x8x32xbf16>,
    %58 = vector.extract_strided_slice %42 {offsets = [0, 0, 96], sizes = [8, 8, 32], strides = [1, 1, 1]} : vector<8x8x192xf32> to vector<8x8x32xf32>
    %59 = arith.truncf %58 : vector<8x8x32xf32> to vector<8x8x32xbf16>
    %c1_31 = arith.constant 1 : index
    %c0_32 = arith.constant 0 : index
    %c0_33 = arith.constant 0 : index
    %c0_34 = arith.constant 0 : index
    %c0_35 = arith.constant 0 : index
    %60 = vector.load %arg6[%c1_31, %c0_32, %c0_33, %c0_34, %c0_35] : memref<2x3x8x8x32xbf16, #tpu.memory_space<vmem>>, vector<1x1x8x8x32xbf16>
    %61 = vector.shape_cast %60 : vector<1x1x8x8x32xbf16> to vector<8x8x32xbf16>
    %62 = vector.shape_cast %59 : vector<8x8x32xbf16> to vector<1x1x8x8x32xbf16>
    tpu.vector_store %arg6[%c1_31, %c0_32, %c0_33, %c0_34, %c0_35], %62 {strides = array<i32>} : memref<2x3x8x8x32xbf16, #tpu.memory_space<vmem>>, vector<1x1x8x8x32xbf16>,
    %63 = vector.extract_strided_slice %42 {offsets = [0, 0, 128], sizes = [8, 8, 32], strides = [1, 1, 1]} : vector<8x8x192xf32> to vector<8x8x32xf32>
    %64 = arith.truncf %63 : vector<8x8x32xf32> to vector<8x8x32xbf16>
    %c1_36 = arith.constant 1 : index
    %c1_37 = arith.constant 1 : index
    %c0_38 = arith.constant 0 : index
    %c0_39 = arith.constant 0 : index
    %c0_40 = arith.constant 0 : index
    %65 = vector.load %arg6[%c1_36, %c1_37, %c0_38, %c0_39, %c0_40] : memref<2x3x8x8x32xbf16, #tpu.memory_space<vmem>>, vector<1x1x8x8x32xbf16>
    %66 = vector.shape_cast %65 : vector<1x1x8x8x32xbf16> to vector<8x8x32xbf16>
    %67 = vector.shape_cast %64 : vector<8x8x32xbf16> to vector<1x1x8x8x32xbf16>
    tpu.vector_store %arg6[%c1_36, %c1_37, %c0_38, %c0_39, %c0_40], %67 {strides = array<i32>} : memref<2x3x8x8x32xbf16, #tpu.memory_space<vmem>>, vector<1x1x8x8x32xbf16>,
    %68 = vector.extract_strided_slice %42 {offsets = [0, 0, 160], sizes = [8, 8, 32], strides = [1, 1, 1]} : vector<8x8x192xf32> to vector<8x8x32xf32>
    %69 = arith.truncf %68 : vector<8x8x32xf32> to vector<8x8x32xbf16>
    %c1_41 = arith.constant 1 : index
    %c2_42 = arith.constant 2 : index
    %c0_43 = arith.constant 0 : index
    %c0_44 = arith.constant 0 : index
    %c0_45 = arith.constant 0 : index
    %70 = vector.load %arg6[%c1_41, %c2_42, %c0_43, %c0_44, %c0_45] : memref<2x3x8x8x32xbf16, #tpu.memory_space<vmem>>, vector<1x1x8x8x32xbf16>
    %71 = vector.shape_cast %70 : vector<1x1x8x8x32xbf16> to vector<8x8x32xbf16>
    %72 = vector.shape_cast %69 : vector<8x8x32xbf16> to vector<1x1x8x8x32xbf16>
    tpu.vector_store %arg6[%c1_41, %c2_42, %c0_43, %c0_44, %c0_45], %72 {strides = array<i32>} : memref<2x3x8x8x32xbf16, #tpu.memory_space<vmem>>, vector<1x1x8x8x32xbf16>,
    return
  }
  func.func @transform_0(%arg0: i32) -> (i32, i32, i32) {
    %c0_i32 = arith.constant 0 : i32
    %c0_i32_0 = arith.constant 0 : i32
    %c0_i32_1 = arith.constant 0 : i32
    return %arg0, %c0_i32, %c0_i32_0 : i32, i32, i32
  }
  func.func @transform_1(%arg0: i32) -> (i32, i32) {
    %c0_i32 = arith.constant 0 : i32
    %c0_i32_0 = arith.constant 0 : i32
    %c0_i32_1 = arith.constant 0 : i32
    return %c0_i32, %c0_i32_0 : i32, i32
  }
  func.func @transform_2(%arg0: i32) -> (i32, i32) {
    %c0_i32 = arith.constant 0 : i32
    %c0_i32_0 = arith.constant 0 : i32
    %c0_i32_1 = arith.constant 0 : i32
    return %c0_i32, %c0_i32_0 : i32, i32
  }
  func.func @transform_3(%arg0: i32) -> (i32, i32) {
    %c0_i32 = arith.constant 0 : i32
    %c0_i32_0 = arith.constant 0 : i32
    %c0_i32_1 = arith.constant 0 : i32
    return %c0_i32, %c0_i32_0 : i32, i32
  }
  func.func @transform_4(%arg0: i32) -> (i32, i32) {
    %c0_i32 = arith.constant 0 : i32
    %c0_i32_0 = arith.constant 0 : i32
    %c0_i32_1 = arith.constant 0 : i32
    return %c0_i32, %c0_i32_0 : i32, i32
  }
  func.func @transform_5(%arg0: i32) -> (i32, i32, i32, i32, i32) {
    %c0_i32 = arith.constant 0 : i32
    %c0_i32_0 = arith.constant 0 : i32
    %c0_i32_1 = arith.constant 0 : i32
    %c0_i32_2 = arith.constant 0 : i32
    %c0_i32_3 = arith.constant 0 : i32
    return %c0_i32, %c0_i32_0, %arg0, %c0_i32_1, %c0_i32_2 : i32, i32, i32, i32, i32
  }
}

module attributes {stable_mosaic.version = 11 : i64} {
  func.func @_gru_chunk_kernel(%arg0: i32, %arg1: i32, %arg2: memref<1x3x8x8x32xbf16, #tpu.memory_space<vmem>>, %arg3: memref<1x32x96xbf16, #tpu.memory_space<vmem>>, %arg4: memref<1x1x96xf32, #tpu.memory_space<vmem>>, %arg5: memref<1x8x8x32xf32, #tpu.memory_space<vmem>>, %arg6: memref<8x32xf32, #tpu.memory_space<vmem>>) attributes {dimension_semantics = [#tpu.dimension_semantics<parallel>, #tpu.dimension_semantics<arbitrary>], iteration_bounds = array<i64: 2, 1>, scalar_prefetch = 0 : i64, scratch_operands = 1 : i64, tpu.core_type = #tpu.core_type<tc>, window_params = [{transform_indices = @transform_0, window_bounds = array<i64: 1, 3, 8, 8, 32>}, {transform_indices = @transform_1, window_bounds = array<i64: 1, 32, 96>}, {transform_indices = @transform_2, window_bounds = array<i64: 1, 1, 96>}, {transform_indices = @transform_3, window_bounds = array<i64: 1, 8, 8, 32>}]} {
    %c0_i32 = arith.constant 0 : i32
    %0 = arith.cmpi eq, %arg1, %c0_i32 : i32
    %1 = arith.extui %0 : i1 to i32
    %c0_i32_0 = arith.constant 0 : i32
    %2 = arith.cmpi ne, %1, %c0_i32_0 : i32
    scf.if %2 {
      %cst_176 = arith.constant 0.000000e+00 : f32
      %385 = vector.broadcast %cst_176 : f32 to vector<8x32xf32>
      %c0_177 = arith.constant 0 : index
      %c0_178 = arith.constant 0 : index
      %386 = vector.load %arg6[%c0_177, %c0_178] : memref<8x32xf32, #tpu.memory_space<vmem>>, vector<8x32xf32>
      tpu.vector_store %arg6[%c0_177, %c0_178], %385 {strides = array<i32>} : memref<8x32xf32, #tpu.memory_space<vmem>>, vector<8x32xf32>,
    } else {
    }
    %c0 = arith.constant 0 : index
    %c0_1 = arith.constant 0 : index
    %c0_2 = arith.constant 0 : index
    %3 = vector.load %arg3[%c0, %c0_1, %c0_2] : memref<1x32x96xbf16, #tpu.memory_space<vmem>>, vector<1x32x96xbf16>
    %4 = vector.shape_cast %3 : vector<1x32x96xbf16> to vector<32x96xbf16>
    %c0_3 = arith.constant 0 : index
    %c0_4 = arith.constant 0 : index
    %c0_5 = arith.constant 0 : index
    %5 = vector.load %arg4[%c0_3, %c0_4, %c0_5] : memref<1x1x96xf32, #tpu.memory_space<vmem>>, vector<1x1x96xf32>
    %6 = vector.shape_cast %5 : vector<1x1x96xf32> to vector<1x96xf32>
    %c0_6 = arith.constant 0 : index
    %c0_7 = arith.constant 0 : index
    %7 = vector.load %arg6[%c0_6, %c0_7] : memref<8x32xf32, #tpu.memory_space<vmem>>, vector<8x32xf32>
    %c0_i32_8 = arith.constant 0 : i32
    %c2_i32 = arith.constant 2 : i32
    %8 = arith.muli %c2_i32, %c0_i32_8 : i32
    %c7_i32 = arith.constant 7 : i32
    %9 = arith.subi %c7_i32, %8 : i32
    %10 = arith.muli %arg0, %9 : i32
    %11 = arith.addi %c0_i32_8, %10 : i32
    %c0_9 = arith.constant 0 : index
    %c0_10 = arith.constant 0 : index
    %12 = arith.index_cast %11 : i32 to index
    %c0_11 = arith.constant 0 : index
    %c0_12 = arith.constant 0 : index
    %13 = vector.load %arg2[%c0_9, %c0_10, %12, %c0_11, %c0_12] : memref<1x3x8x8x32xbf16, #tpu.memory_space<vmem>>, vector<1x1x1x8x32xbf16>
    %14 = vector.shape_cast %13 : vector<1x1x1x8x32xbf16> to vector<8x32xbf16>
    %15 = arith.extf %14 : vector<8x32xbf16> to vector<8x32xf32>
    %c0_13 = arith.constant 0 : index
    %c1 = arith.constant 1 : index
    %16 = arith.index_cast %11 : i32 to index
    %c0_14 = arith.constant 0 : index
    %c0_15 = arith.constant 0 : index
    %17 = vector.load %arg2[%c0_13, %c1, %16, %c0_14, %c0_15] : memref<1x3x8x8x32xbf16, #tpu.memory_space<vmem>>, vector<1x1x1x8x32xbf16>
    %18 = vector.shape_cast %17 : vector<1x1x1x8x32xbf16> to vector<8x32xbf16>
    %19 = arith.extf %18 : vector<8x32xbf16> to vector<8x32xf32>
    %c0_16 = arith.constant 0 : index
    %c2 = arith.constant 2 : index
    %20 = arith.index_cast %11 : i32 to index
    %c0_17 = arith.constant 0 : index
    %c0_18 = arith.constant 0 : index
    %21 = vector.load %arg2[%c0_16, %c2, %20, %c0_17, %c0_18] : memref<1x3x8x8x32xbf16, #tpu.memory_space<vmem>>, vector<1x1x1x8x32xbf16>
    %22 = vector.shape_cast %21 : vector<1x1x1x8x32xbf16> to vector<8x32xbf16>
    %23 = arith.extf %22 : vector<8x32xbf16> to vector<8x32xf32>
    %24 = arith.truncf %7 : vector<8x32xf32> to vector<8x32xbf16>
    %cst = arith.constant dense<0.000000e+00> : vector<8x96xf32>
    %25 = tpu.matmul %24, %4, %cst {dimension_numbers = #tpu.dot_dimension_numbers<[1], [0], [0], [1], [0, 0, 1, 1], [], []>} : vector<8x32xbf16>, vector<32x96xbf16>, vector<8x96xf32> -> vector<8x96xf32>
    %26 = vector.broadcast %6 : vector<1x96xf32> to vector<8x96xf32>
    %27 = arith.addf %25, %26 : vector<8x96xf32>
    %28 = vector.extract_strided_slice %27 {offsets = [0, 0], sizes = [8, 32], strides = [1, 1]} : vector<8x96xf32> to vector<8x32xf32>
    %29 = arith.addf %15, %28 : vector<8x32xf32>
    %30 = arith.negf %29 : vector<8x32xf32>
    %31 = math.exp %30 : vector<8x32xf32>
    %cst_19 = arith.constant 1.000000e+00 : f32
    %32 = vector.broadcast %cst_19 : f32 to vector<8x32xf32>
    %33 = arith.addf %32, %31 : vector<8x32xf32>
    %34 = arith.divf %32, %33 : vector<8x32xf32>
    %35 = vector.extract_strided_slice %27 {offsets = [0, 32], sizes = [8, 32], strides = [1, 1]} : vector<8x96xf32> to vector<8x32xf32>
    %36 = arith.addf %19, %35 : vector<8x32xf32>
    %37 = arith.negf %36 : vector<8x32xf32>
    %38 = math.exp %37 : vector<8x32xf32>
    %cst_20 = arith.constant 1.000000e+00 : f32
    %39 = vector.broadcast %cst_20 : f32 to vector<8x32xf32>
    %40 = arith.addf %39, %38 : vector<8x32xf32>
    %41 = arith.divf %39, %40 : vector<8x32xf32>
    %42 = vector.extract_strided_slice %27 {offsets = [0, 64], sizes = [8, 32], strides = [1, 1]} : vector<8x96xf32> to vector<8x32xf32>
    %43 = arith.mulf %34, %42 : vector<8x32xf32>
    %44 = arith.addf %23, %43 : vector<8x32xf32>
    %45 = math.tanh %44 : vector<8x32xf32>
    %cst_21 = arith.constant 1.000000e+00 : f32
    %46 = vector.broadcast %cst_21 : f32 to vector<8x32xf32>
    %47 = arith.subf %46, %41 : vector<8x32xf32>
    %48 = arith.mulf %47, %45 : vector<8x32xf32>
    %49 = arith.mulf %41, %7 : vector<8x32xf32>
    %50 = arith.addf %48, %49 : vector<8x32xf32>
    %c0_22 = arith.constant 0 : index
    %51 = arith.index_cast %11 : i32 to index
    %c0_23 = arith.constant 0 : index
    %c0_24 = arith.constant 0 : index
    %52 = vector.load %arg5[%c0_22, %51, %c0_23, %c0_24] : memref<1x8x8x32xf32, #tpu.memory_space<vmem>>, vector<1x1x8x32xf32>
    %53 = vector.shape_cast %52 : vector<1x1x8x32xf32> to vector<8x32xf32>
    %54 = vector.shape_cast %50 : vector<8x32xf32> to vector<1x1x8x32xf32>
    tpu.vector_store %arg5[%c0_22, %51, %c0_23, %c0_24], %54 {strides = array<i32>} : memref<1x8x8x32xf32, #tpu.memory_space<vmem>>, vector<1x1x8x32xf32>,
    %c1_i32 = arith.constant 1 : i32
    %c2_i32_25 = arith.constant 2 : i32
    %55 = arith.muli %c2_i32_25, %c1_i32 : i32
    %c7_i32_26 = arith.constant 7 : i32
    %56 = arith.subi %c7_i32_26, %55 : i32
    %57 = arith.muli %arg0, %56 : i32
    %58 = arith.addi %c1_i32, %57 : i32
    %c0_27 = arith.constant 0 : index
    %c0_28 = arith.constant 0 : index
    %59 = arith.index_cast %58 : i32 to index
    %c0_29 = arith.constant 0 : index
    %c0_30 = arith.constant 0 : index
    %60 = vector.load %arg2[%c0_27, %c0_28, %59, %c0_29, %c0_30] : memref<1x3x8x8x32xbf16, #tpu.memory_space<vmem>>, vector<1x1x1x8x32xbf16>
    %61 = vector.shape_cast %60 : vector<1x1x1x8x32xbf16> to vector<8x32xbf16>
    %62 = arith.extf %61 : vector<8x32xbf16> to vector<8x32xf32>
    %c0_31 = arith.constant 0 : index
    %c1_32 = arith.constant 1 : index
    %63 = arith.index_cast %58 : i32 to index
    %c0_33 = arith.constant 0 : index
    %c0_34 = arith.constant 0 : index
    %64 = vector.load %arg2[%c0_31, %c1_32, %63, %c0_33, %c0_34] : memref<1x3x8x8x32xbf16, #tpu.memory_space<vmem>>, vector<1x1x1x8x32xbf16>
    %65 = vector.shape_cast %64 : vector<1x1x1x8x32xbf16> to vector<8x32xbf16>
    %66 = arith.extf %65 : vector<8x32xbf16> to vector<8x32xf32>
    %c0_35 = arith.constant 0 : index
    %c2_36 = arith.constant 2 : index
    %67 = arith.index_cast %58 : i32 to index
    %c0_37 = arith.constant 0 : index
    %c0_38 = arith.constant 0 : index
    %68 = vector.load %arg2[%c0_35, %c2_36, %67, %c0_37, %c0_38] : memref<1x3x8x8x32xbf16, #tpu.memory_space<vmem>>, vector<1x1x1x8x32xbf16>
    %69 = vector.shape_cast %68 : vector<1x1x1x8x32xbf16> to vector<8x32xbf16>
    %70 = arith.extf %69 : vector<8x32xbf16> to vector<8x32xf32>
    %71 = arith.truncf %50 : vector<8x32xf32> to vector<8x32xbf16>
    %cst_39 = arith.constant dense<0.000000e+00> : vector<8x96xf32>
    %72 = tpu.matmul %71, %4, %cst_39 {dimension_numbers = #tpu.dot_dimension_numbers<[1], [0], [0], [1], [0, 0, 1, 1], [], []>} : vector<8x32xbf16>, vector<32x96xbf16>, vector<8x96xf32> -> vector<8x96xf32>
    %73 = vector.broadcast %6 : vector<1x96xf32> to vector<8x96xf32>
    %74 = arith.addf %72, %73 : vector<8x96xf32>
    %75 = vector.extract_strided_slice %74 {offsets = [0, 0], sizes = [8, 32], strides = [1, 1]} : vector<8x96xf32> to vector<8x32xf32>
    %76 = arith.addf %62, %75 : vector<8x32xf32>
    %77 = arith.negf %76 : vector<8x32xf32>
    %78 = math.exp %77 : vector<8x32xf32>
    %cst_40 = arith.constant 1.000000e+00 : f32
    %79 = vector.broadcast %cst_40 : f32 to vector<8x32xf32>
    %80 = arith.addf %79, %78 : vector<8x32xf32>
    %81 = arith.divf %79, %80 : vector<8x32xf32>
    %82 = vector.extract_strided_slice %74 {offsets = [0, 32], sizes = [8, 32], strides = [1, 1]} : vector<8x96xf32> to vector<8x32xf32>
    %83 = arith.addf %66, %82 : vector<8x32xf32>
    %84 = arith.negf %83 : vector<8x32xf32>
    %85 = math.exp %84 : vector<8x32xf32>
    %cst_41 = arith.constant 1.000000e+00 : f32
    %86 = vector.broadcast %cst_41 : f32 to vector<8x32xf32>
    %87 = arith.addf %86, %85 : vector<8x32xf32>
    %88 = arith.divf %86, %87 : vector<8x32xf32>
    %89 = vector.extract_strided_slice %74 {offsets = [0, 64], sizes = [8, 32], strides = [1, 1]} : vector<8x96xf32> to vector<8x32xf32>
    %90 = arith.mulf %81, %89 : vector<8x32xf32>
    %91 = arith.addf %70, %90 : vector<8x32xf32>
    %92 = math.tanh %91 : vector<8x32xf32>
    %cst_42 = arith.constant 1.000000e+00 : f32
    %93 = vector.broadcast %cst_42 : f32 to vector<8x32xf32>
    %94 = arith.subf %93, %88 : vector<8x32xf32>
    %95 = arith.mulf %94, %92 : vector<8x32xf32>
    %96 = arith.mulf %88, %50 : vector<8x32xf32>
    %97 = arith.addf %95, %96 : vector<8x32xf32>
    %c0_43 = arith.constant 0 : index
    %98 = arith.index_cast %58 : i32 to index
    %c0_44 = arith.constant 0 : index
    %c0_45 = arith.constant 0 : index
    %99 = vector.load %arg5[%c0_43, %98, %c0_44, %c0_45] : memref<1x8x8x32xf32, #tpu.memory_space<vmem>>, vector<1x1x8x32xf32>
    %100 = vector.shape_cast %99 : vector<1x1x8x32xf32> to vector<8x32xf32>
    %101 = vector.shape_cast %97 : vector<8x32xf32> to vector<1x1x8x32xf32>
    tpu.vector_store %arg5[%c0_43, %98, %c0_44, %c0_45], %101 {strides = array<i32>} : memref<1x8x8x32xf32, #tpu.memory_space<vmem>>, vector<1x1x8x32xf32>,
    %c2_i32_46 = arith.constant 2 : i32
    %c2_i32_47 = arith.constant 2 : i32
    %102 = arith.muli %c2_i32_47, %c2_i32_46 : i32
    %c7_i32_48 = arith.constant 7 : i32
    %103 = arith.subi %c7_i32_48, %102 : i32
    %104 = arith.muli %arg0, %103 : i32
    %105 = arith.addi %c2_i32_46, %104 : i32
    %c0_49 = arith.constant 0 : index
    %c0_50 = arith.constant 0 : index
    %106 = arith.index_cast %105 : i32 to index
    %c0_51 = arith.constant 0 : index
    %c0_52 = arith.constant 0 : index
    %107 = vector.load %arg2[%c0_49, %c0_50, %106, %c0_51, %c0_52] : memref<1x3x8x8x32xbf16, #tpu.memory_space<vmem>>, vector<1x1x1x8x32xbf16>
    %108 = vector.shape_cast %107 : vector<1x1x1x8x32xbf16> to vector<8x32xbf16>
    %109 = arith.extf %108 : vector<8x32xbf16> to vector<8x32xf32>
    %c0_53 = arith.constant 0 : index
    %c1_54 = arith.constant 1 : index
    %110 = arith.index_cast %105 : i32 to index
    %c0_55 = arith.constant 0 : index
    %c0_56 = arith.constant 0 : index
    %111 = vector.load %arg2[%c0_53, %c1_54, %110, %c0_55, %c0_56] : memref<1x3x8x8x32xbf16, #tpu.memory_space<vmem>>, vector<1x1x1x8x32xbf16>
    %112 = vector.shape_cast %111 : vector<1x1x1x8x32xbf16> to vector<8x32xbf16>
    %113 = arith.extf %112 : vector<8x32xbf16> to vector<8x32xf32>
    %c0_57 = arith.constant 0 : index
    %c2_58 = arith.constant 2 : index
    %114 = arith.index_cast %105 : i32 to index
    %c0_59 = arith.constant 0 : index
    %c0_60 = arith.constant 0 : index
    %115 = vector.load %arg2[%c0_57, %c2_58, %114, %c0_59, %c0_60] : memref<1x3x8x8x32xbf16, #tpu.memory_space<vmem>>, vector<1x1x1x8x32xbf16>
    %116 = vector.shape_cast %115 : vector<1x1x1x8x32xbf16> to vector<8x32xbf16>
    %117 = arith.extf %116 : vector<8x32xbf16> to vector<8x32xf32>
    %118 = arith.truncf %97 : vector<8x32xf32> to vector<8x32xbf16>
    %cst_61 = arith.constant dense<0.000000e+00> : vector<8x96xf32>
    %119 = tpu.matmul %118, %4, %cst_61 {dimension_numbers = #tpu.dot_dimension_numbers<[1], [0], [0], [1], [0, 0, 1, 1], [], []>} : vector<8x32xbf16>, vector<32x96xbf16>, vector<8x96xf32> -> vector<8x96xf32>
    %120 = vector.broadcast %6 : vector<1x96xf32> to vector<8x96xf32>
    %121 = arith.addf %119, %120 : vector<8x96xf32>
    %122 = vector.extract_strided_slice %121 {offsets = [0, 0], sizes = [8, 32], strides = [1, 1]} : vector<8x96xf32> to vector<8x32xf32>
    %123 = arith.addf %109, %122 : vector<8x32xf32>
    %124 = arith.negf %123 : vector<8x32xf32>
    %125 = math.exp %124 : vector<8x32xf32>
    %cst_62 = arith.constant 1.000000e+00 : f32
    %126 = vector.broadcast %cst_62 : f32 to vector<8x32xf32>
    %127 = arith.addf %126, %125 : vector<8x32xf32>
    %128 = arith.divf %126, %127 : vector<8x32xf32>
    %129 = vector.extract_strided_slice %121 {offsets = [0, 32], sizes = [8, 32], strides = [1, 1]} : vector<8x96xf32> to vector<8x32xf32>
    %130 = arith.addf %113, %129 : vector<8x32xf32>
    %131 = arith.negf %130 : vector<8x32xf32>
    %132 = math.exp %131 : vector<8x32xf32>
    %cst_63 = arith.constant 1.000000e+00 : f32
    %133 = vector.broadcast %cst_63 : f32 to vector<8x32xf32>
    %134 = arith.addf %133, %132 : vector<8x32xf32>
    %135 = arith.divf %133, %134 : vector<8x32xf32>
    %136 = vector.extract_strided_slice %121 {offsets = [0, 64], sizes = [8, 32], strides = [1, 1]} : vector<8x96xf32> to vector<8x32xf32>
    %137 = arith.mulf %128, %136 : vector<8x32xf32>
    %138 = arith.addf %117, %137 : vector<8x32xf32>
    %139 = math.tanh %138 : vector<8x32xf32>
    %cst_64 = arith.constant 1.000000e+00 : f32
    %140 = vector.broadcast %cst_64 : f32 to vector<8x32xf32>
    %141 = arith.subf %140, %135 : vector<8x32xf32>
    %142 = arith.mulf %141, %139 : vector<8x32xf32>
    %143 = arith.mulf %135, %97 : vector<8x32xf32>
    %144 = arith.addf %142, %143 : vector<8x32xf32>
    %c0_65 = arith.constant 0 : index
    %145 = arith.index_cast %105 : i32 to index
    %c0_66 = arith.constant 0 : index
    %c0_67 = arith.constant 0 : index
    %146 = vector.load %arg5[%c0_65, %145, %c0_66, %c0_67] : memref<1x8x8x32xf32, #tpu.memory_space<vmem>>, vector<1x1x8x32xf32>
    %147 = vector.shape_cast %146 : vector<1x1x8x32xf32> to vector<8x32xf32>
    %148 = vector.shape_cast %144 : vector<8x32xf32> to vector<1x1x8x32xf32>
    tpu.vector_store %arg5[%c0_65, %145, %c0_66, %c0_67], %148 {strides = array<i32>} : memref<1x8x8x32xf32, #tpu.memory_space<vmem>>, vector<1x1x8x32xf32>,
    %c3_i32 = arith.constant 3 : i32
    %c2_i32_68 = arith.constant 2 : i32
    %149 = arith.muli %c2_i32_68, %c3_i32 : i32
    %c7_i32_69 = arith.constant 7 : i32
    %150 = arith.subi %c7_i32_69, %149 : i32
    %151 = arith.muli %arg0, %150 : i32
    %152 = arith.addi %c3_i32, %151 : i32
    %c0_70 = arith.constant 0 : index
    %c0_71 = arith.constant 0 : index
    %153 = arith.index_cast %152 : i32 to index
    %c0_72 = arith.constant 0 : index
    %c0_73 = arith.constant 0 : index
    %154 = vector.load %arg2[%c0_70, %c0_71, %153, %c0_72, %c0_73] : memref<1x3x8x8x32xbf16, #tpu.memory_space<vmem>>, vector<1x1x1x8x32xbf16>
    %155 = vector.shape_cast %154 : vector<1x1x1x8x32xbf16> to vector<8x32xbf16>
    %156 = arith.extf %155 : vector<8x32xbf16> to vector<8x32xf32>
    %c0_74 = arith.constant 0 : index
    %c1_75 = arith.constant 1 : index
    %157 = arith.index_cast %152 : i32 to index
    %c0_76 = arith.constant 0 : index
    %c0_77 = arith.constant 0 : index
    %158 = vector.load %arg2[%c0_74, %c1_75, %157, %c0_76, %c0_77] : memref<1x3x8x8x32xbf16, #tpu.memory_space<vmem>>, vector<1x1x1x8x32xbf16>
    %159 = vector.shape_cast %158 : vector<1x1x1x8x32xbf16> to vector<8x32xbf16>
    %160 = arith.extf %159 : vector<8x32xbf16> to vector<8x32xf32>
    %c0_78 = arith.constant 0 : index
    %c2_79 = arith.constant 2 : index
    %161 = arith.index_cast %152 : i32 to index
    %c0_80 = arith.constant 0 : index
    %c0_81 = arith.constant 0 : index
    %162 = vector.load %arg2[%c0_78, %c2_79, %161, %c0_80, %c0_81] : memref<1x3x8x8x32xbf16, #tpu.memory_space<vmem>>, vector<1x1x1x8x32xbf16>
    %163 = vector.shape_cast %162 : vector<1x1x1x8x32xbf16> to vector<8x32xbf16>
    %164 = arith.extf %163 : vector<8x32xbf16> to vector<8x32xf32>
    %165 = arith.truncf %144 : vector<8x32xf32> to vector<8x32xbf16>
    %cst_82 = arith.constant dense<0.000000e+00> : vector<8x96xf32>
    %166 = tpu.matmul %165, %4, %cst_82 {dimension_numbers = #tpu.dot_dimension_numbers<[1], [0], [0], [1], [0, 0, 1, 1], [], []>} : vector<8x32xbf16>, vector<32x96xbf16>, vector<8x96xf32> -> vector<8x96xf32>
    %167 = vector.broadcast %6 : vector<1x96xf32> to vector<8x96xf32>
    %168 = arith.addf %166, %167 : vector<8x96xf32>
    %169 = vector.extract_strided_slice %168 {offsets = [0, 0], sizes = [8, 32], strides = [1, 1]} : vector<8x96xf32> to vector<8x32xf32>
    %170 = arith.addf %156, %169 : vector<8x32xf32>
    %171 = arith.negf %170 : vector<8x32xf32>
    %172 = math.exp %171 : vector<8x32xf32>
    %cst_83 = arith.constant 1.000000e+00 : f32
    %173 = vector.broadcast %cst_83 : f32 to vector<8x32xf32>
    %174 = arith.addf %173, %172 : vector<8x32xf32>
    %175 = arith.divf %173, %174 : vector<8x32xf32>
    %176 = vector.extract_strided_slice %168 {offsets = [0, 32], sizes = [8, 32], strides = [1, 1]} : vector<8x96xf32> to vector<8x32xf32>
    %177 = arith.addf %160, %176 : vector<8x32xf32>
    %178 = arith.negf %177 : vector<8x32xf32>
    %179 = math.exp %178 : vector<8x32xf32>
    %cst_84 = arith.constant 1.000000e+00 : f32
    %180 = vector.broadcast %cst_84 : f32 to vector<8x32xf32>
    %181 = arith.addf %180, %179 : vector<8x32xf32>
    %182 = arith.divf %180, %181 : vector<8x32xf32>
    %183 = vector.extract_strided_slice %168 {offsets = [0, 64], sizes = [8, 32], strides = [1, 1]} : vector<8x96xf32> to vector<8x32xf32>
    %184 = arith.mulf %175, %183 : vector<8x32xf32>
    %185 = arith.addf %164, %184 : vector<8x32xf32>
    %186 = math.tanh %185 : vector<8x32xf32>
    %cst_85 = arith.constant 1.000000e+00 : f32
    %187 = vector.broadcast %cst_85 : f32 to vector<8x32xf32>
    %188 = arith.subf %187, %182 : vector<8x32xf32>
    %189 = arith.mulf %188, %186 : vector<8x32xf32>
    %190 = arith.mulf %182, %144 : vector<8x32xf32>
    %191 = arith.addf %189, %190 : vector<8x32xf32>
    %c0_86 = arith.constant 0 : index
    %192 = arith.index_cast %152 : i32 to index
    %c0_87 = arith.constant 0 : index
    %c0_88 = arith.constant 0 : index
    %193 = vector.load %arg5[%c0_86, %192, %c0_87, %c0_88] : memref<1x8x8x32xf32, #tpu.memory_space<vmem>>, vector<1x1x8x32xf32>
    %194 = vector.shape_cast %193 : vector<1x1x8x32xf32> to vector<8x32xf32>
    %195 = vector.shape_cast %191 : vector<8x32xf32> to vector<1x1x8x32xf32>
    tpu.vector_store %arg5[%c0_86, %192, %c0_87, %c0_88], %195 {strides = array<i32>} : memref<1x8x8x32xf32, #tpu.memory_space<vmem>>, vector<1x1x8x32xf32>,
    %c4_i32 = arith.constant 4 : i32
    %c2_i32_89 = arith.constant 2 : i32
    %196 = arith.muli %c2_i32_89, %c4_i32 : i32
    %c7_i32_90 = arith.constant 7 : i32
    %197 = arith.subi %c7_i32_90, %196 : i32
    %198 = arith.muli %arg0, %197 : i32
    %199 = arith.addi %c4_i32, %198 : i32
    %c0_91 = arith.constant 0 : index
    %c0_92 = arith.constant 0 : index
    %200 = arith.index_cast %199 : i32 to index
    %c0_93 = arith.constant 0 : index
    %c0_94 = arith.constant 0 : index
    %201 = vector.load %arg2[%c0_91, %c0_92, %200, %c0_93, %c0_94] : memref<1x3x8x8x32xbf16, #tpu.memory_space<vmem>>, vector<1x1x1x8x32xbf16>
    %202 = vector.shape_cast %201 : vector<1x1x1x8x32xbf16> to vector<8x32xbf16>
    %203 = arith.extf %202 : vector<8x32xbf16> to vector<8x32xf32>
    %c0_95 = arith.constant 0 : index
    %c1_96 = arith.constant 1 : index
    %204 = arith.index_cast %199 : i32 to index
    %c0_97 = arith.constant 0 : index
    %c0_98 = arith.constant 0 : index
    %205 = vector.load %arg2[%c0_95, %c1_96, %204, %c0_97, %c0_98] : memref<1x3x8x8x32xbf16, #tpu.memory_space<vmem>>, vector<1x1x1x8x32xbf16>
    %206 = vector.shape_cast %205 : vector<1x1x1x8x32xbf16> to vector<8x32xbf16>
    %207 = arith.extf %206 : vector<8x32xbf16> to vector<8x32xf32>
    %c0_99 = arith.constant 0 : index
    %c2_100 = arith.constant 2 : index
    %208 = arith.index_cast %199 : i32 to index
    %c0_101 = arith.constant 0 : index
    %c0_102 = arith.constant 0 : index
    %209 = vector.load %arg2[%c0_99, %c2_100, %208, %c0_101, %c0_102] : memref<1x3x8x8x32xbf16, #tpu.memory_space<vmem>>, vector<1x1x1x8x32xbf16>
    %210 = vector.shape_cast %209 : vector<1x1x1x8x32xbf16> to vector<8x32xbf16>
    %211 = arith.extf %210 : vector<8x32xbf16> to vector<8x32xf32>
    %212 = arith.truncf %191 : vector<8x32xf32> to vector<8x32xbf16>
    %cst_103 = arith.constant dense<0.000000e+00> : vector<8x96xf32>
    %213 = tpu.matmul %212, %4, %cst_103 {dimension_numbers = #tpu.dot_dimension_numbers<[1], [0], [0], [1], [0, 0, 1, 1], [], []>} : vector<8x32xbf16>, vector<32x96xbf16>, vector<8x96xf32> -> vector<8x96xf32>
    %214 = vector.broadcast %6 : vector<1x96xf32> to vector<8x96xf32>
    %215 = arith.addf %213, %214 : vector<8x96xf32>
    %216 = vector.extract_strided_slice %215 {offsets = [0, 0], sizes = [8, 32], strides = [1, 1]} : vector<8x96xf32> to vector<8x32xf32>
    %217 = arith.addf %203, %216 : vector<8x32xf32>
    %218 = arith.negf %217 : vector<8x32xf32>
    %219 = math.exp %218 : vector<8x32xf32>
    %cst_104 = arith.constant 1.000000e+00 : f32
    %220 = vector.broadcast %cst_104 : f32 to vector<8x32xf32>
    %221 = arith.addf %220, %219 : vector<8x32xf32>
    %222 = arith.divf %220, %221 : vector<8x32xf32>
    %223 = vector.extract_strided_slice %215 {offsets = [0, 32], sizes = [8, 32], strides = [1, 1]} : vector<8x96xf32> to vector<8x32xf32>
    %224 = arith.addf %207, %223 : vector<8x32xf32>
    %225 = arith.negf %224 : vector<8x32xf32>
    %226 = math.exp %225 : vector<8x32xf32>
    %cst_105 = arith.constant 1.000000e+00 : f32
    %227 = vector.broadcast %cst_105 : f32 to vector<8x32xf32>
    %228 = arith.addf %227, %226 : vector<8x32xf32>
    %229 = arith.divf %227, %228 : vector<8x32xf32>
    %230 = vector.extract_strided_slice %215 {offsets = [0, 64], sizes = [8, 32], strides = [1, 1]} : vector<8x96xf32> to vector<8x32xf32>
    %231 = arith.mulf %222, %230 : vector<8x32xf32>
    %232 = arith.addf %211, %231 : vector<8x32xf32>
    %233 = math.tanh %232 : vector<8x32xf32>
    %cst_106 = arith.constant 1.000000e+00 : f32
    %234 = vector.broadcast %cst_106 : f32 to vector<8x32xf32>
    %235 = arith.subf %234, %229 : vector<8x32xf32>
    %236 = arith.mulf %235, %233 : vector<8x32xf32>
    %237 = arith.mulf %229, %191 : vector<8x32xf32>
    %238 = arith.addf %236, %237 : vector<8x32xf32>
    %c0_107 = arith.constant 0 : index
    %239 = arith.index_cast %199 : i32 to index
    %c0_108 = arith.constant 0 : index
    %c0_109 = arith.constant 0 : index
    %240 = vector.load %arg5[%c0_107, %239, %c0_108, %c0_109] : memref<1x8x8x32xf32, #tpu.memory_space<vmem>>, vector<1x1x8x32xf32>
    %241 = vector.shape_cast %240 : vector<1x1x8x32xf32> to vector<8x32xf32>
    %242 = vector.shape_cast %238 : vector<8x32xf32> to vector<1x1x8x32xf32>
    tpu.vector_store %arg5[%c0_107, %239, %c0_108, %c0_109], %242 {strides = array<i32>} : memref<1x8x8x32xf32, #tpu.memory_space<vmem>>, vector<1x1x8x32xf32>,
    %c5_i32 = arith.constant 5 : i32
    %c2_i32_110 = arith.constant 2 : i32
    %243 = arith.muli %c2_i32_110, %c5_i32 : i32
    %c7_i32_111 = arith.constant 7 : i32
    %244 = arith.subi %c7_i32_111, %243 : i32
    %245 = arith.muli %arg0, %244 : i32
    %246 = arith.addi %c5_i32, %245 : i32
    %c0_112 = arith.constant 0 : index
    %c0_113 = arith.constant 0 : index
    %247 = arith.index_cast %246 : i32 to index
    %c0_114 = arith.constant 0 : index
    %c0_115 = arith.constant 0 : index
    %248 = vector.load %arg2[%c0_112, %c0_113, %247, %c0_114, %c0_115] : memref<1x3x8x8x32xbf16, #tpu.memory_space<vmem>>, vector<1x1x1x8x32xbf16>
    %249 = vector.shape_cast %248 : vector<1x1x1x8x32xbf16> to vector<8x32xbf16>
    %250 = arith.extf %249 : vector<8x32xbf16> to vector<8x32xf32>
    %c0_116 = arith.constant 0 : index
    %c1_117 = arith.constant 1 : index
    %251 = arith.index_cast %246 : i32 to index
    %c0_118 = arith.constant 0 : index
    %c0_119 = arith.constant 0 : index
    %252 = vector.load %arg2[%c0_116, %c1_117, %251, %c0_118, %c0_119] : memref<1x3x8x8x32xbf16, #tpu.memory_space<vmem>>, vector<1x1x1x8x32xbf16>
    %253 = vector.shape_cast %252 : vector<1x1x1x8x32xbf16> to vector<8x32xbf16>
    %254 = arith.extf %253 : vector<8x32xbf16> to vector<8x32xf32>
    %c0_120 = arith.constant 0 : index
    %c2_121 = arith.constant 2 : index
    %255 = arith.index_cast %246 : i32 to index
    %c0_122 = arith.constant 0 : index
    %c0_123 = arith.constant 0 : index
    %256 = vector.load %arg2[%c0_120, %c2_121, %255, %c0_122, %c0_123] : memref<1x3x8x8x32xbf16, #tpu.memory_space<vmem>>, vector<1x1x1x8x32xbf16>
    %257 = vector.shape_cast %256 : vector<1x1x1x8x32xbf16> to vector<8x32xbf16>
    %258 = arith.extf %257 : vector<8x32xbf16> to vector<8x32xf32>
    %259 = arith.truncf %238 : vector<8x32xf32> to vector<8x32xbf16>
    %cst_124 = arith.constant dense<0.000000e+00> : vector<8x96xf32>
    %260 = tpu.matmul %259, %4, %cst_124 {dimension_numbers = #tpu.dot_dimension_numbers<[1], [0], [0], [1], [0, 0, 1, 1], [], []>} : vector<8x32xbf16>, vector<32x96xbf16>, vector<8x96xf32> -> vector<8x96xf32>
    %261 = vector.broadcast %6 : vector<1x96xf32> to vector<8x96xf32>
    %262 = arith.addf %260, %261 : vector<8x96xf32>
    %263 = vector.extract_strided_slice %262 {offsets = [0, 0], sizes = [8, 32], strides = [1, 1]} : vector<8x96xf32> to vector<8x32xf32>
    %264 = arith.addf %250, %263 : vector<8x32xf32>
    %265 = arith.negf %264 : vector<8x32xf32>
    %266 = math.exp %265 : vector<8x32xf32>
    %cst_125 = arith.constant 1.000000e+00 : f32
    %267 = vector.broadcast %cst_125 : f32 to vector<8x32xf32>
    %268 = arith.addf %267, %266 : vector<8x32xf32>
    %269 = arith.divf %267, %268 : vector<8x32xf32>
    %270 = vector.extract_strided_slice %262 {offsets = [0, 32], sizes = [8, 32], strides = [1, 1]} : vector<8x96xf32> to vector<8x32xf32>
    %271 = arith.addf %254, %270 : vector<8x32xf32>
    %272 = arith.negf %271 : vector<8x32xf32>
    %273 = math.exp %272 : vector<8x32xf32>
    %cst_126 = arith.constant 1.000000e+00 : f32
    %274 = vector.broadcast %cst_126 : f32 to vector<8x32xf32>
    %275 = arith.addf %274, %273 : vector<8x32xf32>
    %276 = arith.divf %274, %275 : vector<8x32xf32>
    %277 = vector.extract_strided_slice %262 {offsets = [0, 64], sizes = [8, 32], strides = [1, 1]} : vector<8x96xf32> to vector<8x32xf32>
    %278 = arith.mulf %269, %277 : vector<8x32xf32>
    %279 = arith.addf %258, %278 : vector<8x32xf32>
    %280 = math.tanh %279 : vector<8x32xf32>
    %cst_127 = arith.constant 1.000000e+00 : f32
    %281 = vector.broadcast %cst_127 : f32 to vector<8x32xf32>
    %282 = arith.subf %281, %276 : vector<8x32xf32>
    %283 = arith.mulf %282, %280 : vector<8x32xf32>
    %284 = arith.mulf %276, %238 : vector<8x32xf32>
    %285 = arith.addf %283, %284 : vector<8x32xf32>
    %c0_128 = arith.constant 0 : index
    %286 = arith.index_cast %246 : i32 to index
    %c0_129 = arith.constant 0 : index
    %c0_130 = arith.constant 0 : index
    %287 = vector.load %arg5[%c0_128, %286, %c0_129, %c0_130] : memref<1x8x8x32xf32, #tpu.memory_space<vmem>>, vector<1x1x8x32xf32>
    %288 = vector.shape_cast %287 : vector<1x1x8x32xf32> to vector<8x32xf32>
    %289 = vector.shape_cast %285 : vector<8x32xf32> to vector<1x1x8x32xf32>
    tpu.vector_store %arg5[%c0_128, %286, %c0_129, %c0_130], %289 {strides = array<i32>} : memref<1x8x8x32xf32, #tpu.memory_space<vmem>>, vector<1x1x8x32xf32>,
    %c6_i32 = arith.constant 6 : i32
    %c2_i32_131 = arith.constant 2 : i32
    %290 = arith.muli %c2_i32_131, %c6_i32 : i32
    %c7_i32_132 = arith.constant 7 : i32
    %291 = arith.subi %c7_i32_132, %290 : i32
    %292 = arith.muli %arg0, %291 : i32
    %293 = arith.addi %c6_i32, %292 : i32
    %c0_133 = arith.constant 0 : index
    %c0_134 = arith.constant 0 : index
    %294 = arith.index_cast %293 : i32 to index
    %c0_135 = arith.constant 0 : index
    %c0_136 = arith.constant 0 : index
    %295 = vector.load %arg2[%c0_133, %c0_134, %294, %c0_135, %c0_136] : memref<1x3x8x8x32xbf16, #tpu.memory_space<vmem>>, vector<1x1x1x8x32xbf16>
    %296 = vector.shape_cast %295 : vector<1x1x1x8x32xbf16> to vector<8x32xbf16>
    %297 = arith.extf %296 : vector<8x32xbf16> to vector<8x32xf32>
    %c0_137 = arith.constant 0 : index
    %c1_138 = arith.constant 1 : index
    %298 = arith.index_cast %293 : i32 to index
    %c0_139 = arith.constant 0 : index
    %c0_140 = arith.constant 0 : index
    %299 = vector.load %arg2[%c0_137, %c1_138, %298, %c0_139, %c0_140] : memref<1x3x8x8x32xbf16, #tpu.memory_space<vmem>>, vector<1x1x1x8x32xbf16>
    %300 = vector.shape_cast %299 : vector<1x1x1x8x32xbf16> to vector<8x32xbf16>
    %301 = arith.extf %300 : vector<8x32xbf16> to vector<8x32xf32>
    %c0_141 = arith.constant 0 : index
    %c2_142 = arith.constant 2 : index
    %302 = arith.index_cast %293 : i32 to index
    %c0_143 = arith.constant 0 : index
    %c0_144 = arith.constant 0 : index
    %303 = vector.load %arg2[%c0_141, %c2_142, %302, %c0_143, %c0_144] : memref<1x3x8x8x32xbf16, #tpu.memory_space<vmem>>, vector<1x1x1x8x32xbf16>
    %304 = vector.shape_cast %303 : vector<1x1x1x8x32xbf16> to vector<8x32xbf16>
    %305 = arith.extf %304 : vector<8x32xbf16> to vector<8x32xf32>
    %306 = arith.truncf %285 : vector<8x32xf32> to vector<8x32xbf16>
    %cst_145 = arith.constant dense<0.000000e+00> : vector<8x96xf32>
    %307 = tpu.matmul %306, %4, %cst_145 {dimension_numbers = #tpu.dot_dimension_numbers<[1], [0], [0], [1], [0, 0, 1, 1], [], []>} : vector<8x32xbf16>, vector<32x96xbf16>, vector<8x96xf32> -> vector<8x96xf32>
    %308 = vector.broadcast %6 : vector<1x96xf32> to vector<8x96xf32>
    %309 = arith.addf %307, %308 : vector<8x96xf32>
    %310 = vector.extract_strided_slice %309 {offsets = [0, 0], sizes = [8, 32], strides = [1, 1]} : vector<8x96xf32> to vector<8x32xf32>
    %311 = arith.addf %297, %310 : vector<8x32xf32>
    %312 = arith.negf %311 : vector<8x32xf32>
    %313 = math.exp %312 : vector<8x32xf32>
    %cst_146 = arith.constant 1.000000e+00 : f32
    %314 = vector.broadcast %cst_146 : f32 to vector<8x32xf32>
    %315 = arith.addf %314, %313 : vector<8x32xf32>
    %316 = arith.divf %314, %315 : vector<8x32xf32>
    %317 = vector.extract_strided_slice %309 {offsets = [0, 32], sizes = [8, 32], strides = [1, 1]} : vector<8x96xf32> to vector<8x32xf32>
    %318 = arith.addf %301, %317 : vector<8x32xf32>
    %319 = arith.negf %318 : vector<8x32xf32>
    %320 = math.exp %319 : vector<8x32xf32>
    %cst_147 = arith.constant 1.000000e+00 : f32
    %321 = vector.broadcast %cst_147 : f32 to vector<8x32xf32>
    %322 = arith.addf %321, %320 : vector<8x32xf32>
    %323 = arith.divf %321, %322 : vector<8x32xf32>
    %324 = vector.extract_strided_slice %309 {offsets = [0, 64], sizes = [8, 32], strides = [1, 1]} : vector<8x96xf32> to vector<8x32xf32>
    %325 = arith.mulf %316, %324 : vector<8x32xf32>
    %326 = arith.addf %305, %325 : vector<8x32xf32>
    %327 = math.tanh %326 : vector<8x32xf32>
    %cst_148 = arith.constant 1.000000e+00 : f32
    %328 = vector.broadcast %cst_148 : f32 to vector<8x32xf32>
    %329 = arith.subf %328, %323 : vector<8x32xf32>
    %330 = arith.mulf %329, %327 : vector<8x32xf32>
    %331 = arith.mulf %323, %285 : vector<8x32xf32>
    %332 = arith.addf %330, %331 : vector<8x32xf32>
    %c0_149 = arith.constant 0 : index
    %333 = arith.index_cast %293 : i32 to index
    %c0_150 = arith.constant 0 : index
    %c0_151 = arith.constant 0 : index
    %334 = vector.load %arg5[%c0_149, %333, %c0_150, %c0_151] : memref<1x8x8x32xf32, #tpu.memory_space<vmem>>, vector<1x1x8x32xf32>
    %335 = vector.shape_cast %334 : vector<1x1x8x32xf32> to vector<8x32xf32>
    %336 = vector.shape_cast %332 : vector<8x32xf32> to vector<1x1x8x32xf32>
    tpu.vector_store %arg5[%c0_149, %333, %c0_150, %c0_151], %336 {strides = array<i32>} : memref<1x8x8x32xf32, #tpu.memory_space<vmem>>, vector<1x1x8x32xf32>,
    %c7_i32_152 = arith.constant 7 : i32
    %c2_i32_153 = arith.constant 2 : i32
    %337 = arith.muli %c2_i32_153, %c7_i32_152 : i32
    %c7_i32_154 = arith.constant 7 : i32
    %338 = arith.subi %c7_i32_154, %337 : i32
    %339 = arith.muli %arg0, %338 : i32
    %340 = arith.addi %c7_i32_152, %339 : i32
    %c0_155 = arith.constant 0 : index
    %c0_156 = arith.constant 0 : index
    %341 = arith.index_cast %340 : i32 to index
    %c0_157 = arith.constant 0 : index
    %c0_158 = arith.constant 0 : index
    %342 = vector.load %arg2[%c0_155, %c0_156, %341, %c0_157, %c0_158] : memref<1x3x8x8x32xbf16, #tpu.memory_space<vmem>>, vector<1x1x1x8x32xbf16>
    %343 = vector.shape_cast %342 : vector<1x1x1x8x32xbf16> to vector<8x32xbf16>
    %344 = arith.extf %343 : vector<8x32xbf16> to vector<8x32xf32>
    %c0_159 = arith.constant 0 : index
    %c1_160 = arith.constant 1 : index
    %345 = arith.index_cast %340 : i32 to index
    %c0_161 = arith.constant 0 : index
    %c0_162 = arith.constant 0 : index
    %346 = vector.load %arg2[%c0_159, %c1_160, %345, %c0_161, %c0_162] : memref<1x3x8x8x32xbf16, #tpu.memory_space<vmem>>, vector<1x1x1x8x32xbf16>
    %347 = vector.shape_cast %346 : vector<1x1x1x8x32xbf16> to vector<8x32xbf16>
    %348 = arith.extf %347 : vector<8x32xbf16> to vector<8x32xf32>
    %c0_163 = arith.constant 0 : index
    %c2_164 = arith.constant 2 : index
    %349 = arith.index_cast %340 : i32 to index
    %c0_165 = arith.constant 0 : index
    %c0_166 = arith.constant 0 : index
    %350 = vector.load %arg2[%c0_163, %c2_164, %349, %c0_165, %c0_166] : memref<1x3x8x8x32xbf16, #tpu.memory_space<vmem>>, vector<1x1x1x8x32xbf16>
    %351 = vector.shape_cast %350 : vector<1x1x1x8x32xbf16> to vector<8x32xbf16>
    %352 = arith.extf %351 : vector<8x32xbf16> to vector<8x32xf32>
    %353 = arith.truncf %332 : vector<8x32xf32> to vector<8x32xbf16>
    %cst_167 = arith.constant dense<0.000000e+00> : vector<8x96xf32>
    %354 = tpu.matmul %353, %4, %cst_167 {dimension_numbers = #tpu.dot_dimension_numbers<[1], [0], [0], [1], [0, 0, 1, 1], [], []>} : vector<8x32xbf16>, vector<32x96xbf16>, vector<8x96xf32> -> vector<8x96xf32>
    %355 = vector.broadcast %6 : vector<1x96xf32> to vector<8x96xf32>
    %356 = arith.addf %354, %355 : vector<8x96xf32>
    %357 = vector.extract_strided_slice %356 {offsets = [0, 0], sizes = [8, 32], strides = [1, 1]} : vector<8x96xf32> to vector<8x32xf32>
    %358 = arith.addf %344, %357 : vector<8x32xf32>
    %359 = arith.negf %358 : vector<8x32xf32>
    %360 = math.exp %359 : vector<8x32xf32>
    %cst_168 = arith.constant 1.000000e+00 : f32
    %361 = vector.broadcast %cst_168 : f32 to vector<8x32xf32>
    %362 = arith.addf %361, %360 : vector<8x32xf32>
    %363 = arith.divf %361, %362 : vector<8x32xf32>
    %364 = vector.extract_strided_slice %356 {offsets = [0, 32], sizes = [8, 32], strides = [1, 1]} : vector<8x96xf32> to vector<8x32xf32>
    %365 = arith.addf %348, %364 : vector<8x32xf32>
    %366 = arith.negf %365 : vector<8x32xf32>
    %367 = math.exp %366 : vector<8x32xf32>
    %cst_169 = arith.constant 1.000000e+00 : f32
    %368 = vector.broadcast %cst_169 : f32 to vector<8x32xf32>
    %369 = arith.addf %368, %367 : vector<8x32xf32>
    %370 = arith.divf %368, %369 : vector<8x32xf32>
    %371 = vector.extract_strided_slice %356 {offsets = [0, 64], sizes = [8, 32], strides = [1, 1]} : vector<8x96xf32> to vector<8x32xf32>
    %372 = arith.mulf %363, %371 : vector<8x32xf32>
    %373 = arith.addf %352, %372 : vector<8x32xf32>
    %374 = math.tanh %373 : vector<8x32xf32>
    %cst_170 = arith.constant 1.000000e+00 : f32
    %375 = vector.broadcast %cst_170 : f32 to vector<8x32xf32>
    %376 = arith.subf %375, %370 : vector<8x32xf32>
    %377 = arith.mulf %376, %374 : vector<8x32xf32>
    %378 = arith.mulf %370, %332 : vector<8x32xf32>
    %379 = arith.addf %377, %378 : vector<8x32xf32>
    %c0_171 = arith.constant 0 : index
    %380 = arith.index_cast %340 : i32 to index
    %c0_172 = arith.constant 0 : index
    %c0_173 = arith.constant 0 : index
    %381 = vector.load %arg5[%c0_171, %380, %c0_172, %c0_173] : memref<1x8x8x32xf32, #tpu.memory_space<vmem>>, vector<1x1x8x32xf32>
    %382 = vector.shape_cast %381 : vector<1x1x8x32xf32> to vector<8x32xf32>
    %383 = vector.shape_cast %379 : vector<8x32xf32> to vector<1x1x8x32xf32>
    tpu.vector_store %arg5[%c0_171, %380, %c0_172, %c0_173], %383 {strides = array<i32>} : memref<1x8x8x32xf32, #tpu.memory_space<vmem>>, vector<1x1x8x32xf32>,
    %c8_i32 = arith.constant 8 : i32
    %c0_174 = arith.constant 0 : index
    %c0_175 = arith.constant 0 : index
    %384 = vector.load %arg6[%c0_174, %c0_175] : memref<8x32xf32, #tpu.memory_space<vmem>>, vector<8x32xf32>
    tpu.vector_store %arg6[%c0_174, %c0_175], %379 {strides = array<i32>} : memref<8x32xf32, #tpu.memory_space<vmem>>, vector<8x32xf32>,
    return
  }
  func.func @transform_0(%arg0: i32, %arg1: i32) -> (i32, i32, i32, i32, i32) {
    %c2_i32 = arith.constant 2 : i32
    %0 = arith.muli %c2_i32, %arg1 : i32
    %c0_i32 = arith.constant 0 : i32
    %1 = arith.subi %c0_i32, %0 : i32
    %2 = arith.muli %arg0, %1 : i32
    %3 = arith.addi %arg1, %2 : i32
    %c0_i32_0 = arith.constant 0 : i32
    %c0_i32_1 = arith.constant 0 : i32
    %c0_i32_2 = arith.constant 0 : i32
    %c0_i32_3 = arith.constant 0 : i32
    return %arg0, %c0_i32_0, %3, %c0_i32_1, %c0_i32_2 : i32, i32, i32, i32, i32
  }
  func.func @transform_1(%arg0: i32, %arg1: i32) -> (i32, i32, i32) {
    %c0_i32 = arith.constant 0 : i32
    %c0_i32_0 = arith.constant 0 : i32
    %c0_i32_1 = arith.constant 0 : i32
    return %arg0, %c0_i32, %c0_i32_0 : i32, i32, i32
  }
  func.func @transform_2(%arg0: i32, %arg1: i32) -> (i32, i32, i32) {
    %c0_i32 = arith.constant 0 : i32
    %c0_i32_0 = arith.constant 0 : i32
    %c0_i32_1 = arith.constant 0 : i32
    return %arg0, %c0_i32, %c0_i32_0 : i32, i32, i32
  }
  func.func @transform_3(%arg0: i32, %arg1: i32) -> (i32, i32, i32, i32) {
    %c2_i32 = arith.constant 2 : i32
    %0 = arith.muli %c2_i32, %arg1 : i32
    %c0_i32 = arith.constant 0 : i32
    %1 = arith.subi %c0_i32, %0 : i32
    %2 = arith.muli %arg0, %1 : i32
    %3 = arith.addi %arg1, %2 : i32
    %c0_i32_0 = arith.constant 0 : i32
    %c0_i32_1 = arith.constant 0 : i32
    %c0_i32_2 = arith.constant 0 : i32
    return %arg0, %3, %c0_i32_0, %c0_i32_1 : i32, i32, i32, i32
  }
}

</mosaic_0001>

<llo_original>
// kernel: bidirectional_gru_forward.3
$region0: #{bidirectional_gru_forward.3}
  #allocation0 [shape = 'u32[]', space=smem, size = 0x4, offset = 0x4, fixed_abs, tag = 'smem constant byte address 0x4 - core index']
  #allocation1 [shape = 'u32[144,128]{1,0:T(1,128)}', space=vmem, size = 0x12000, scoped, tag = 'internal scratch']
  #allocation2 [shape = 'f32[8,32]{1,0:T(8,128)}', space=vmem, size = 0x1000, scoped, tag = 'scratch operand']
  %s0 = inlined_call_operand.vmem [shape: bf16[2,3,8,8,32], index: 0, kind: input, shape index: {}]
  %s1 = inlined_call_operand.vmem [shape: bf16[2,32,96], index: 1, kind: input, shape index: {}]
  %s2 = inlined_call_operand.vmem [shape: f32[2,1,96], index: 2, kind: input, shape index: {}]
  %s3 = inlined_call_operand.vmem [shape: f32[2,8,8,32], index: 3, kind: output, shape index: {}]
  %s4 = sld [smem:[#allocation0]]
  $region49: #{bidirectional_gru_forward.3} parent=0
    _
  %s6 = ssub.s32 1, %s4
  %s7 = scalar_select 0, %s6, %s4
  loop: start=0, step=1, limit=4
  $region2: #{bidirectional_gru_forward.3} parent=0 // loop_pre_header
    _
  $region3: #{bidirectional_gru_forward.3} parent=0 // loop_header
    %s9 = sphi 0, %s13
    %p10 = scmp.ge.s32.totalorder %s9, 4
    %s16 = sphi 0, %s28
    %s17 = sphi 0, %s24
    %s18 = sphi 0, %s16
    %s19 = sphi 0, %s17
    %s20 = sphi 0, %s18
    %s21 = sphi 0, %s19
    %s41 = sphi 0, %s43
    %s44 = sphi 0, %s41
    %s45 = sphi 0, %s44
    %s61 = sphi 0, %s45
    %s67 = sphi 0, %s69
    %s70 = sphi 0, %s67
    %s71 = sphi 0, %s70
    %s87 = sphi 0, %s71
    %s93 = sphi 0, %s95
    %s96 = sphi 0, %s93
    %s97 = sphi 0, %s96
    %s113 = sphi 0, %s97
    %s129 = sphi 0, %s131
    %s132 = sphi 0, %s129
    %s133 = sphi 0, %s132
    %s149 = sphi 0, %s133
  $region4: #{bidirectional_gru_forward.3} parent=0 // loop_header_branch
    %12 = sbr.rel (%p10) target = $region8
  $region5: #{bidirectional_gru_forward.3} parent=0 // loop_body
    %s14 = ssub.s32 %s9, 1
    %s15 = ssub.s32 %s9, 2
    %s22 = sadd.s32 1, %s17
    %p23 = scmp.ge.s32.totalorder %s22, 1
    %s24 = scalar_select %p23, 0, %s22
    %s25 = sadd.s32 1, %s16
    %s26 = scalar_select %p23, %s25, %s16
    %p27 = scmp.ge.s32.totalorder %s26, 2
    %s28 = scalar_select %p27, 0, %s26
    %s29 = smul.u32 %s17, 2
    %s30 = ssub.s32 0, %s29
    %s31 = smul.u32 %s16, %s30
    %s32 = sadd.s32 %s17, %s31
    %s33 = smul.u32 %s24, 2
    %s34 = ssub.s32 0, %s33
    %s35 = smul.u32 %s28, %s34
    %s36 = sadd.s32 %s24, %s35
    %s37 = ssub.s32 %s16, %s28
    %s38 = ssub.s32 %s32, %s36
    %s39 = sor.u32 %s37, %s38
    %p40 = scmp.eq.s32.totalorder %s39, 0
    %s42 = sadd.s32 %s41, 1
    %s43 = scalar_select %p40, %s41, %s42
    %p46 = pneg %p40
    %p47 = scmp.eq.s32.totalorder %s9, 1
    %p48 = por %p46, %p47
    %p49 = scmp.ne.s32.totalorder %s41, %s44
    %p50 = scmp.eq.s32.totalorder %s9, 0
    %p51 = por %p49, %p50
    %p52 = scmp.ne.s32.totalorder %s41, %s44
    %p53 = scmp.eq.s32.totalorder %s14, 1
    %p54 = por %p52, %p53
    %p55 = scmp.ne.s32.totalorder %s44, %s45
    %p56 = scmp.eq.s32.totalorder %s14, 0
    %p57 = por %p55, %p56
    %p58 = scmp.ne.s32.totalorder %s44, %s45
    %p59 = scmp.eq.s32.totalorder %s15, 1
    %p60 = por %p58, %p59
    %p62 = scmp.ne.s32.totalorder %s45, %s61
    %p63 = scmp.eq.s32.totalorder %s15, 0
    %p64 = por %p62, %p63
    %s65 = ssub.s32 %s16, %s28
    %p66 = scmp.eq.s32.totalorder %s65, 0
    %s68 = sadd.s32 %s67, 1
    %s69 = scalar_select %p66, %s67, %s68
    %p72 = pneg %p66
    %p73 = scmp.eq.s32.totalorder %s9, 1
    %p74 = por %p72, %p73
    %p75 = scmp.ne.s32.totalorder %s67, %s70
    %p76 = scmp.eq.s32.totalorder %s9, 0
    %p77 = por %p75, %p76
    %p78 = scmp.ne.s32.totalorder %s67, %s70
    %p79 = scmp.eq.s32.totalorder %s14, 1
    %p80 = por %p78, %p79
    %p81 = scmp.ne.s32.totalorder %s70, %s71
    %p82 = scmp.eq.s32.totalorder %s14, 0
    %p83 = por %p81, %p82
    %p84 = scmp.ne.s32.totalorder %s70, %s71
    %p85 = scmp.eq.s32.totalorder %s15, 1
    %p86 = por %p84, %p85
    %p88 = scmp.ne.s32.totalorder %s71, %s87
    %p89 = scmp.eq.s32.totalorder %s15, 0
    %p90 = por %p88, %p89
    %s91 = ssub.s32 %s16, %s28
    %p92 = scmp.eq.s32.totalorder %s91, 0
    %s94 = sadd.s32 %s93, 1
    %s95 = scalar_select %p92, %s93, %s94
    %p98 = pneg %p92
    %p99 = scmp.eq.s32.totalorder %s9, 1
    %p100 = por %p98, %p99
    %p101 = scmp.ne.s32.totalorder %s93, %s96
    %p102 = scmp.eq.s32.totalorder %s9, 0
    %p103 = por %p101, %p102
    %p104 = scmp.ne.s32.totalorder %s93, %s96
    %p105 = scmp.eq.s32.totalorder %s14, 1
    %p106 = por %p104, %p105
    %p107 = scmp.ne.s32.totalorder %s96, %s97
    %p108 = scmp.eq.s32.totalorder %s14, 0
    %p109 = por %p107, %p108
    %p110 = scmp.ne.s32.totalorder %s96, %s97
    %p111 = scmp.eq.s32.totalorder %s15, 1
    %p112 = por %p110, %p111
    %p114 = scmp.ne.s32.totalorder %s97, %s113
    %p115 = scmp.eq.s32.totalorder %s15, 0
    %p116 = por %p114, %p115
    %s117 = smul.u32 %s17, 2
    %s118 = ssub.s32 0, %s117
    %s119 = smul.u32 %s16, %s118
    %s120 = sadd.s32 %s17, %s119
    %s121 = smul.u32 %s24, 2
    %s122 = ssub.s32 0, %s121
    %s123 = smul.u32 %s28, %s122
    %s124 = sadd.s32 %s24, %s123
    %s125 = ssub.s32 %s16, %s28
    %s126 = ssub.s32 %s120, %s124
    %s127 = sor.u32 %s125, %s126
    %p128 = scmp.eq.s32.totalorder %s127, 0
    %s130 = sadd.s32 %s129, 1
    %s131 = scalar_select %p128, %s129, %s130
    %p134 = pneg %p128
    %p135 = scmp.eq.s32.totalorder %s9, 1
    %p136 = por %p134, %p135
    %p137 = scmp.ne.s32.totalorder %s129, %s132
    %p138 = scmp.eq.s32.totalorder %s9, 0
    %p139 = por %p137, %p138
    %p140 = scmp.ne.s32.totalorder %s129, %s132
    %p141 = scmp.eq.s32.totalorder %s14, 1
    %p142 = por %p140, %p141
    %p143 = scmp.ne.s32.totalorder %s132, %s133
    %p144 = scmp.eq.s32.totalorder %s14, 0
    %p145 = por %p143, %p144
    %p146 = scmp.ne.s32.totalorder %s132, %s133
    %p147 = scmp.eq.s32.totalorder %s15, 1
    %p148 = por %p146, %p147
    %p150 = scmp.ne.s32.totalorder %s133, %s149
    %p151 = scmp.eq.s32.totalorder %s15, 0
    %p152 = por %p150, %p151
    %p153 = scmp.le.s32.totalorder 1, %s9
    %p154 = scmp.lt.s32.totalorder %s9, 3
    %p155 = pnand %p153, %p154
    %p156 = pneg %p155
    // Predicated region
    $region9: #{bidirectional_gru_forward.3} parent=5 // pred_check
      _
    $region10: #{bidirectional_gru_forward.3} parent=5 // pred_check_branch
      %158 = sbr.rel (%p155) target = $region12
    $region11: #{bidirectional_gru_forward.3} parent=5 // pred_region
      %s159 = ssub.s32 %s9, 1
    $region12: #{bidirectional_gru_forward.3} parent=5 // pred_fallthru
      _
    %p160 = scmp.lt.s32.totalorder %s9, 2
    // Predicated region
    $region13: #{bidirectional_gru_forward.3} parent=5 // pred_check
      %p161 = pneg %p160
    $region14: #{bidirectional_gru_forward.3} parent=5 // pred_check_branch
      %163 = sbr.rel (%p161) target = $region16
    $region15: #{bidirectional_gru_forward.3} parent=5 // pred_region
      // Predicated region
      $region17: #{bidirectional_gru_forward.3} parent=15 // pred_check
        %p164 = pneg %p51
      $region18: #{bidirectional_gru_forward.3} parent=15 // pred_check_branch
        %166 = sbr.rel (%p164) target = $region20
      $region19: #{bidirectional_gru_forward.3} parent=15 // pred_region
        %s167 = smul.u32 %s17, 2
        %s168 = ssub.s32 0, %s167
        %s169 = smul.u32 %s16, %s168
        %s170 = sadd.s32 %s17, %s169
        %s171 = smul.u32 8, %s170
        %p172 = scmp.lt.s32.totalorder %s16, 1
        %s173 = scalar_select %p172, %s16, 1
        %p174 = scmp.lt.s32.totalorder %s171, 7
        %s175 = scalar_select %p174, %s171, 7
        %s176 = smul.addr %s173, 24
        %s177 = sadd.s32 %s175, %s176
        %s178 = smul.addr %s177, 4
        %s179 = scalar_lea.vmem %s0, %s178
        %s180 = smul.u32 %s17, 2
        %s181 = ssub.s32 0, %s180
        %s182 = smul.u32 %s16, %s181
        %s183 = sadd.s32 %s17, %s182
        %s184 = smul.u32 8, %s183
      $region20: #{bidirectional_gru_forward.3} parent=15 // pred_fallthru
        _
      // Predicated region
      $region21: #{bidirectional_gru_forward.3} parent=15 // pred_check
        %p185 = pneg %p77
      $region22: #{bidirectional_gru_forward.3} parent=15 // pred_check_branch
        %187 = sbr.rel (%p185) target = $region24
      $region23: #{bidirectional_gru_forward.3} parent=15 // pred_region
        %p188 = scmp.lt.s32.totalorder %s16, 1
        %s189 = scalar_select %p188, %s16, 1
        %s190 = smul.addr %s189, 4
        %s191 = smul.addr %s190, 4
        %s192 = scalar_lea.vmem %s1, %s191
      $region24: #{bidirectional_gru_forward.3} parent=15 // pred_fallthru
        _
      // Predicated region
      $region25: #{bidirectional_gru_forward.3} parent=15 // pred_check
        %p193 = pneg %p103
      $region26: #{bidirectional_gru_forward.3} parent=15 // pred_check_branch
        %195 = sbr.rel (%p193) target = $region28
      $region27: #{bidirectional_gru_forward.3} parent=15 // pred_region
        %p196 = scmp.lt.s32.totalorder %s16, 1
        %s197 = scalar_select %p196, %s16, 1
        %s198 = scalar_lea.vmem %s2, %s197
      $region28: #{bidirectional_gru_forward.3} parent=15 // pred_fallthru
        _
    $region16: #{bidirectional_gru_forward.3} parent=5 // pred_fallthru
      _
    %p199 = scmp.le.s32.totalorder 1, %s9
    %p200 = scmp.lt.s32.totalorder %s9, 3
    %p201 = pnand %p199, %p200
    %p202 = pneg %p201
    // Predicated region
    $region29: #{bidirectional_gru_forward.3} parent=5 // pred_check
      _
    $region30: #{bidirectional_gru_forward.3} parent=5 // pred_check_branch
      %204 = sbr.rel (%p201) target = $region32
    $region31: #{bidirectional_gru_forward.3} parent=5 // pred_region
      %s205 = ssub.s32 %s9, 1
      %s206 = smul.u32 %s19, 2
      %s207 = ssub.s32 0, %s206
      %s208 = smul.u32 %s18, %s207
      %s209 = sadd.s32 %s19, %s208
      %s210 = smul.u32 8, %s209
      %p211 = scmp.lt.s32.totalorder %s18, 1
      %s212 = scalar_select %p211, %s18, 1
      %p213 = scmp.lt.s32.totalorder %s210, 7
      %s214 = scalar_select %p213, %s210, 7
      %s215 = smul.addr %s212, 24
      %s216 = sadd.s32 %s214, %s215
      %s217 = smul.addr %s216, 4
      %s218 = scalar_lea.vmem %s0, %s217
      %p219 = pneg %p57
      %p220 = pneg %p54
      %p221 = scmp.lt.s32.totalorder %s18, 1
      %s222 = scalar_select %p221, %s18, 1
      %s223 = smul.addr %s222, 4
      %s224 = smul.addr %s223, 4
      %s225 = scalar_lea.vmem %s1, %s224
      %p226 = pneg %p83
      %p227 = pneg %p80
      %p228 = scmp.lt.s32.totalorder %s18, 1
      %s229 = scalar_select %p228, %s18, 1
      %s230 = scalar_lea.vmem %s2, %s229
      %p231 = pneg %p109
      %p232 = pneg %p106
      %p233 = pneg %p145
      %p234 = pneg %p142
      %s235 = smul.u32 %s19, 2
      %s236 = ssub.s32 0, %s235
      %s237 = smul.u32 %s18, %s236
      %s238 = sadd.s32 %s19, %s237
      %s239 = smul.u32 8, %s238
      %p240 = scmp.lt.s32.totalorder %s18, 1
      %s241 = scalar_select %p240, %s18, 1
      %p242 = scmp.lt.s32.totalorder %s239, 7
      %s243 = scalar_select %p242, %s239, 7
      %s244 = smul.addr %s241, 8
      %s245 = sadd.s32 %s243, %s244
      %s246 = smul.addr %s245, 8
      %s247 = scalar_lea.vmem %s3, %s246
      %s248 = smul.u32 %s19, 2
      %s249 = ssub.s32 0, %s248
      %s250 = smul.u32 %s18, %s249
      %s251 = sadd.s32 %s19, %s250
      %s252 = smul.u32 8, %s251
      %p253 = scmp.lt.s32.totalorder %s18, 1
      %s254 = scalar_select %p253, %s18, 1
      %p255 = scmp.lt.s32.totalorder %s252, 7
      %s256 = scalar_select %p255, %s252, 7
      %s257 = smul.addr %s254, 24
      %s258 = sadd.s32 %s256, %s257
      %s259 = smul.addr %s258, 4
      %s260 = scalar_lea.vmem %s0, %s259
      %s261 = smul.u32 %s19, 2
      %s262 = ssub.s32 0, %s261
      %s263 = smul.u32 %s18, %s262
      %s264 = sadd.s32 %s19, %s263
      %s265 = smul.u32 8, %s264
      %p266 = scmp.lt.s32.totalorder %s18, 1
      %s267 = scalar_select %p266, %s18, 1
      %s268 = smul.addr %s267, 4
      %s269 = smul.addr %s268, 4
      %s270 = scalar_lea.vmem %s1, %s269
      %p271 = scmp.lt.s32.totalorder %s18, 1
      %s272 = scalar_select %p271, %s18, 1
      %s273 = scalar_lea.vmem %s2, %s272
      %s274 = smul.u32 %s19, 2
      %s275 = ssub.s32 0, %s274
      %s276 = smul.u32 %s18, %s275
      %s277 = sadd.s32 %s19, %s276
      %s278 = smul.u32 8, %s277
      %p279 = scmp.lt.s32.totalorder %s18, 1
      %s280 = scalar_select %p279, %s18, 1
      %p281 = scmp.lt.s32.totalorder %s278, 7
      %s282 = scalar_select %p281, %s278, 7
      %s283 = smul.addr %s280, 8
      %s284 = sadd.s32 %s282, %s283
      %s285 = smul.addr %s284, 8
      %s286 = scalar_lea.vmem %s3, %s285
      %s287 = smul.u32 %s19, 2
      %s288 = ssub.s32 0, %s287
      %s289 = smul.u32 %s18, %s288
      %s290 = sadd.s32 %s19, %s289
      %s291 = smul.u32 8, %s290
      %p293 = scmp.eq.s32.totalorder %s19, 0
      // Predicated region
      $region33: #{bidirectional_gru_forward.3} parent=31 // pred_check
        %p294 = pneg %p293
      $region34: #{bidirectional_gru_forward.3} parent=31 // pred_check_branch
        %296 = sbr.rel (%p294) target = $region36
      $region35: #{bidirectional_gru_forward.3} parent=31 // pred_region
        %vm297 = vcmask 261120
        %298 = vst.msk [vmem:[#allocation2] sm:$0xff] %vm297, 0.0
      $region36: #{bidirectional_gru_forward.3} parent=31 // pred_fallthru
        _
      %v299 = vld [vmem:[%s270] sm:$0xf]
      %v300 = vld [vmem:[%s270 + $0x4] sm:$0xf]
      %v301 = vld [vmem:[%s270 + $0x8] sm:$0xf]
      %v302 = vld [vmem:[%s270 + $0xc] sm:$0xf]
      %v303 = vld [vmem:[%s273] sm:$0x1]
      %v304 = vld [vmem:[#allocation2] sm:$0xff]
      %s305 = smul.u32 %s18, 7
      %s306 = smul.addr %s305, 4
      %s307 = scalar_lea.vmem %s260, %s306
      %v308 = vld [vmem:[%s307] sm:$0xf]
      %v309 = vunpack.c.l.bf16 %v308
      %s310 = sadd.s32 %s305, 8
      %s311 = smul.addr %s310, 4
      %s312 = scalar_lea.vmem %s260, %s311
      %v313 = vld [vmem:[%s312] sm:$0xf]
      %v314 = vunpack.c.l.bf16 %v313
      %s315 = sadd.s32 %s305, 16
      %s316 = smul.addr %s315, 4
      %s317 = scalar_lea.vmem %s260, %s316
      %v318 = vld [vmem:[%s317] sm:$0xf]
      %v319 = vunpack.c.l.bf16 %v318
      %v320 = vpack.c.bf16 %v304, %v304
      %v322 = vlaneseq
      %v323 = vshrl.u32 %v322, 7
      %v324 = vsub.s32 0, %v323
      %v325 = vrot.slane %v303, %v324
      %v331 = vunpack.c.l.b16 %v299
      %v332 = vunpack.c.l.b16 %v300
      %v333 = vunpack.c.l.b16 %v301
      %v334 = vunpack.c.l.b16 %v302
      %v335 = vpack.c.b16 %v332, %v331
      %v336 = vpack.c.b16 %v334, %v333
      %vm339 = vcmask 261120
      %v341 = vsel %vm339, %v320, 0
      %343 = vmatprep.subr.bf16.mxu0 0
      %344 = vmatpush1.bf16.msra.mxu0 0
      %345 = vmatprep.subr.bf16.mxu0 0
      %346 = vmatpush1.bf16.msra.mxu0 0
      %347 = vmatprep.subr.bf16.mxu0 0
      %348 = vmatpush1.bf16.msra.mxu0 0
      %349 = vmatprep.subr.bf16.mxu0 0
      %350 = vmatpush1.bf16.msra.mxu0 0
      %351 = vmatprep.subr.bf16.mxu0 0
      %352 = vmatpush1.bf16.msra.mxu0 0
      %353 = vmatprep.subr.bf16.mxu0 0
      %354 = vmatpush1.bf16.msra.mxu0 0
      %355 = vmatprep.subr.bf16.mxu0 0
      %356 = vmatpush1.bf16.msra.mxu0 %v336
      %357 = vmatprep.subr.bf16.mxu0 0
      %358 = vmatpush1.bf16.msra.mxu0 %v335
      %359 = vmatprep.subr.bf16.mxu0 0
      %360 = vmatpush2.bf16.msra.mxu0 0
      %361 = vmatprep.subr.bf16.mxu0 0
      %362 = vmatpush2.bf16.msra.mxu0 0
      %363 = vmatprep.subr.bf16.mxu0 0
      %364 = vmatpush2.bf16.msra.mxu0 0
      %365 = vmatprep.subr.bf16.mxu0 0
      %366 = vmatpush2.bf16.msra.mxu0 0
      %367 = vmatprep.subr.bf16.mxu0 0
      %368 = vmatpush2.bf16.msra.mxu0 0
      %369 = vmatprep.subr.bf16.mxu0 0
      %370 = vmatpush2.bf16.msra.mxu0 0
      %371 = vmatprep.subr.bf16.mxu0 0
      %372 = vmatpush2.bf16.msra.mxu0 0
      %373 = vmatprep.subr.bf16.mxu0 0
      %374 = vmatpush2.bf16.msra.mxu0 0
      %375 = vmatprep.mubr.bf16.mxu0 0
      %376 = vmatmul.mubr.bf16.gmra.mxu0 %v341
      %v377 = vpop.f32.mrf.mxu0
      %v378 = vadd.f32 %v325, %v377
      %v379 = vpop.f32.mrf.mxu0
      %v380 = vpop.f32.mrf.mxu0
      %v381 = vpop.f32.mrf.mxu0
      %382 = vdwg.mxu0
      %v383 = vadd.f32 %v309, %v378
      %v384 = vxor.u32 %v383, 2147483648
      %v385 = vmul.f32 %v384, 1.442695
      %v386 = vpow.pop %v385
      %v387 = vadd.f32 %v386, 1.0
      %v388 = vrcp.pop %v387
      %v389 = vmul.f32 1.0, %v388
      %391 = vrot.lane.b32.xlu0 %v378, 96
      %v392 = vpop.permute.xlu0 %391
      %v394 = vadd.f32 %v314, %v392
      %v395 = vxor.u32 %v394, 2147483648
      %v396 = vmul.f32 %v395, 1.442695
      %v397 = vpow.pop %v396
      %v398 = vadd.f32 %v397, 1.0
      %v399 = vrcp.pop %v398
      %v400 = vmul.f32 1.0, %v399
      %401 = vrot.lane.b32.xlu0 %v378, 64
      %v402 = vpop.permute.xlu0 %401
      %v404 = vmul.f32 %v389, %v402
      %v405 = vadd.f32 %v319, %v404
      %v406 = vtanh.pop %v405
      %v407 = vsub.f32 1.0, %v400
      %v408 = vmul.f32 %v407, %v406
      %v409 = vmul.f32 %v400, %v304
      %v410 = vadd.f32 %v408, %v409
      %s411 = smul.u32 %s305, 8
      %s412 = scalar_lea.vmem %s286, %s411
      %413 = vst.msk [vmem:[%s412] sm:$0xff] %vm339, %v410
      %s414 = smul.u32 %s18, 5
      %s415 = sadd.s32 %s414, 1
      %s416 = smul.addr %s415, 4
      %s417 = scalar_lea.vmem %s260, %s416
      %v418 = vld [vmem:[%s417] sm:$0xf]
      %v419 = vunpack.c.l.bf16 %v418
      %s420 = sadd.s32 %s415, 8
      %s421 = smul.addr %s420, 4
      %s422 = scalar_lea.vmem %s260, %s421
      %v423 = vld [vmem:[%s422] sm:$0xf]
      %v424 = vunpack.c.l.bf16 %v423
      %s425 = sadd.s32 %s415, 16
      %s426 = smul.addr %s425, 4
      %s427 = scalar_lea.vmem %s260, %s426
      %v428 = vld [vmem:[%s427] sm:$0xf]
      %v429 = vunpack.c.l.bf16 %v428
      %v430 = vpack.c.bf16 %v410, %v410
      %v432 = vsel %vm339, %v430, 0
      %434 = vmatprep.subr.bf16.mxu0 0
      %435 = vmatpush1.bf16.msra.mxu0 0
      %436 = vmatprep.subr.bf16.mxu0 0
      %437 = vmatpush1.bf16.msra.mxu0 0
      %438 = vmatprep.subr.bf16.mxu0 0
      %439 = vmatpush1.bf16.msra.mxu0 0
      %440 = vmatprep.subr.bf16.mxu0 0
      %441 = vmatpush1.bf16.msra.mxu0 0
      %442 = vmatprep.subr.bf16.mxu0 0
      %443 = vmatpush1.bf16.msra.mxu0 0
      %444 = vmatprep.subr.bf16.mxu0 0
      %445 = vmatpush1.bf16.msra.mxu0 0
      %446 = vmatprep.subr.bf16.mxu0 0
      %447 = vmatpush1.bf16.msra.mxu0 %v336
      %448 = vmatprep.subr.bf16.mxu0 0
      %449 = vmatpush1.bf16.msra.mxu0 %v335
      %450 = vmatprep.subr.bf16.mxu0 0
      %451 = vmatpush2.bf16.msra.mxu0 0
      %452 = vmatprep.subr.bf16.mxu0 0
      %453 = vmatpush2.bf16.msra.mxu0 0
      %454 = vmatprep.subr.bf16.mxu0 0
      %455 = vmatpush2.bf16.msra.mxu0 0
      %456 = vmatprep.subr.bf16.mxu0 0
      %457 = vmatpush2.bf16.msra.mxu0 0
      %458 = vmatprep.subr.bf16.mxu0 0
      %459 = vmatpush2.bf16.msra.mxu0 0
      %460 = vmatprep.subr.bf16.mxu0 0
      %461 = vmatpush2.bf16.msra.mxu0 0
      %462 = vmatprep.subr.bf16.mxu0 0
      %463 = vmatpush2.bf16.msra.mxu0 0
      %464 = vmatprep.subr.bf16.mxu0 0
      %465 = vmatpush2.bf16.msra.mxu0 0
      %466 = vmatprep.mubr.bf16.mxu0 0
      %467 = vmatmul.mubr.bf16.gmra.mxu0 %v432
      %v468 = vpop.f32.mrf.mxu0
      %v469 = vadd.f32 %v325, %v468
      %v470 = vpop.f32.mrf.mxu0
      %v471 = vpop.f32.mrf.mxu0
      %v472 = vpop.f32.mrf.mxu0
      %473 = vdwg.mxu0
      %v474 = vadd.f32 %v419, %v469
      %v475 = vxor.u32 %v474, 2147483648
      %v476 = vmul.f32 %v475, 1.442695
      %v477 = vpow.pop %v476
      %v478 = vadd.f32 %v477, 1.0
      %v479 = vrcp.pop %v478
      %v480 = vmul.f32 1.0, %v479
      %482 = vrot.lane.b32.xlu0 %v469, 96
      %v483 = vpop.permute.xlu0 %482
      %v485 = vadd.f32 %v424, %v483
      %v486 = vxor.u32 %v485, 2147483648
      %v487 = vmul.f32 %v486, 1.442695
      %v488 = vpow.pop %v487
      %v489 = vadd.f32 %v488, 1.0
      %v490 = vrcp.pop %v489
      %v491 = vmul.f32 1.0, %v490
      %492 = vrot.lane.b32.xlu0 %v469, 64
      %v493 = vpop.permute.xlu0 %492
      %v495 = vmul.f32 %v480, %v493
      %v496 = vadd.f32 %v429, %v495
      %v497 = vtanh.pop %v496
      %v498 = vsub.f32 1.0, %v491
      %v499 = vmul.f32 %v498, %v497
      %v500 = vmul.f32 %v491, %v410
      %v501 = vadd.f32 %v499, %v500
      %s502 = smul.u32 %s415, 8
      %s503 = scalar_lea.vmem %s286, %s502
      %504 = vst.msk [vmem:[%s503] sm:$0xff] %vm339, %v501
      %s505 = smul.u32 %s18, 3
      %s506 = sadd.s32 %s505, 2
      %s507 = smul.addr %s506, 4
      %s508 = scalar_lea.vmem %s260, %s507
      %v509 = vld [vmem:[%s508] sm:$0xf]
      %v510 = vunpack.c.l.bf16 %v509
      %s511 = sadd.s32 %s506, 8
      %s512 = smul.addr %s511, 4
      %s513 = scalar_lea.vmem %s260, %s512
      %v514 = vld [vmem:[%s513] sm:$0xf]
      %v515 = vunpack.c.l.bf16 %v514
      %s516 = sadd.s32 %s506, 16
      %s517 = smul.addr %s516, 4
      %s518 = scalar_lea.vmem %s260, %s517
      %v519 = vld [vmem:[%s518] sm:$0xf]
      %v520 = vunpack.c.l.bf16 %v519
      %v521 = vpack.c.bf16 %v501, %v501
      %v523 = vsel %vm339, %v521, 0
      %525 = vmatprep.subr.bf16.mxu0 0
      %526 = vmatpush1.bf16.msra.mxu0 0
      %527 = vmatprep.subr.bf16.mxu0 0
      %528 = vmatpush1.bf16.msra.mxu0 0
      %529 = vmatprep.subr.bf16.mxu0 0
      %530 = vmatpush1.bf16.msra.mxu0 0
      %531 = vmatprep.subr.bf16.mxu0 0
      %532 = vmatpush1.bf16.msra.mxu0 0
      %533 = vmatprep.subr.bf16.mxu0 0
      %534 = vmatpush1.bf16.msra.mxu0 0
      %535 = vmatprep.subr.bf16.mxu0 0
      %536 = vmatpush1.bf16.msra.mxu0 0
      %537 = vmatprep.subr.bf16.mxu0 0
      %538 = vmatpush1.bf16.msra.mxu0 %v336
      %539 = vmatprep.subr.bf16.mxu0 0
      %540 = vmatpush1.bf16.msra.mxu0 %v335
      %541 = vmatprep.subr.bf16.mxu0 0
      %542 = vmatpush2.bf16.msra.mxu0 0
      %543 = vmatprep.subr.bf16.mxu0 0
      %544 = vmatpush2.bf16.msra.mxu0 0
      %545 = vmatprep.subr.bf16.mxu0 0
      %546 = vmatpush2.bf16.msra.mxu0 0
      %547 = vmatprep.subr.bf16.mxu0 0
      %548 = vmatpush2.bf16.msra.mxu0 0
      %549 = vmatprep.subr.bf16.mxu0 0
      %550 = vmatpush2.bf16.msra.mxu0 0
      %551 = vmatprep.subr.bf16.mxu0 0
      %552 = vmatpush2.bf16.msra.mxu0 0
      %553 = vmatprep.subr.bf16.mxu0 0
      %554 = vmatpush2.bf16.msra.mxu0 0
      %555 = vmatprep.subr.bf16.mxu0 0
      %556 = vmatpush2.bf16.msra.mxu0 0
      %557 = vmatprep.mubr.bf16.mxu0 0
      %558 = vmatmul.mubr.bf16.gmra.mxu0 %v523
      %v559 = vpop.f32.mrf.mxu0
      %v560 = vadd.f32 %v325, %v559
      %v561 = vpop.f32.mrf.mxu0
      %v562 = vpop.f32.mrf.mxu0
      %v563 = vpop.f32.mrf.mxu0
      %564 = vdwg.mxu0
      %v565 = vadd.f32 %v510, %v560
      %v566 = vxor.u32 %v565, 2147483648
      %v567 = vmul.f32 %v566, 1.442695
      %v568 = vpow.pop %v567
      %v569 = vadd.f32 %v568, 1.0
      %v570 = vrcp.pop %v569
      %v571 = vmul.f32 1.0, %v570
      %573 = vrot.lane.b32.xlu0 %v560, 96
      %v574 = vpop.permute.xlu0 %573
      %v576 = vadd.f32 %v515, %v574
      %v577 = vxor.u32 %v576, 2147483648
      %v578 = vmul.f32 %v577, 1.442695
      %v579 = vpow.pop %v578
      %v580 = vadd.f32 %v579, 1.0
      %v581 = vrcp.pop %v580
      %v582 = vmul.f32 1.0, %v581
      %583 = vrot.lane.b32.xlu0 %v560, 64
      %v584 = vpop.permute.xlu0 %583
      %v586 = vmul.f32 %v571, %v584
      %v587 = vadd.f32 %v520, %v586
      %v588 = vtanh.pop %v587
      %v589 = vsub.f32 1.0, %v582
      %v590 = vmul.f32 %v589, %v588
      %v591 = vmul.f32 %v582, %v501
      %v592 = vadd.f32 %v590, %v591
      %s593 = smul.u32 %s506, 8
      %s594 = scalar_lea.vmem %s286, %s593
      %595 = vst.msk [vmem:[%s594] sm:$0xff] %vm339, %v592
      %s596 = sadd.s32 %s18, 3
      %s597 = smul.addr %s596, 4
      %s598 = scalar_lea.vmem %s260, %s597
      %v599 = vld [vmem:[%s598] sm:$0xf]
      %v600 = vunpack.c.l.bf16 %v599
      %s601 = sadd.s32 %s596, 8
      %s602 = smul.addr %s601, 4
      %s603 = scalar_lea.vmem %s260, %s602
      %v604 = vld [vmem:[%s603] sm:$0xf]
      %v605 = vunpack.c.l.bf16 %v604
      %s606 = sadd.s32 %s596, 16
      %s607 = smul.addr %s606, 4
      %s608 = scalar_lea.vmem %s260, %s607
      %v609 = vld [vmem:[%s608] sm:$0xf]
      %v610 = vunpack.c.l.bf16 %v609
      %v611 = vpack.c.bf16 %v592, %v592
      %v613 = vsel %vm339, %v611, 0
      %615 = vmatprep.subr.bf16.mxu0 0
      %616 = vmatpush1.bf16.msra.mxu0 0
      %617 = vmatprep.subr.bf16.mxu0 0
      %618 = vmatpush1.bf16.msra.mxu0 0
      %619 = vmatprep.subr.bf16.mxu0 0
      %620 = vmatpush1.bf16.msra.mxu0 0
      %621 = vmatprep.subr.bf16.mxu0 0
      %622 = vmatpush1.bf16.msra.mxu0 0
      %623 = vmatprep.subr.bf16.mxu0 0
      %624 = vmatpush1.bf16.msra.mxu0 0
      %625 = vmatprep.subr.bf16.mxu0 0
      %626 = vmatpush1.bf16.msra.mxu0 0
      %627 = vmatprep.subr.bf16.mxu0 0
      %628 = vmatpush1.bf16.msra.mxu0 %v336
      %629 = vmatprep.subr.bf16.mxu0 0
      %630 = vmatpush1.bf16.msra.mxu0 %v335
      %631 = vmatprep.subr.bf16.mxu0 0
      %632 = vmatpush2.bf16.msra.mxu0 0
      %633 = vmatprep.subr.bf16.mxu0 0
      %634 = vmatpush2.bf16.msra.mxu0 0
      %635 = vmatprep.subr.bf16.mxu0 0
      %636 = vmatpush2.bf16.msra.mxu0 0
      %637 = vmatprep.subr.bf16.mxu0 0
      %638 = vmatpush2.bf16.msra.mxu0 0
      %639 = vmatprep.subr.bf16.mxu0 0
      %640 = vmatpush2.bf16.msra.mxu0 0
      %641 = vmatprep.subr.bf16.mxu0 0
      %642 = vmatpush2.bf16.msra.mxu0 0
      %643 = vmatprep.subr.bf16.mxu0 0
      %644 = vmatpush2.bf16.msra.mxu0 0
      %645 = vmatprep.subr.bf16.mxu0 0
      %646 = vmatpush2.bf16.msra.mxu0 0
      %647 = vmatprep.mubr.bf16.mxu0 0
      %648 = vmatmul.mubr.bf16.gmra.mxu0 %v613
      %v649 = vpop.f32.mrf.mxu0
      %v650 = vadd.f32 %v325, %v649
      %v651 = vpop.f32.mrf.mxu0
      %v652 = vpop.f32.mrf.mxu0
      %v653 = vpop.f32.mrf.mxu0
      %654 = vdwg.mxu0
      %v655 = vadd.f32 %v600, %v650
      %v656 = vxor.u32 %v655, 2147483648
      %v657 = vmul.f32 %v656, 1.442695
      %v658 = vpow.pop %v657
      %v659 = vadd.f32 %v658, 1.0
      %v660 = vrcp.pop %v659
      %v661 = vmul.f32 1.0, %v660
      %663 = vrot.lane.b32.xlu0 %v650, 96
      %v664 = vpop.permute.xlu0 %663
      %v666 = vadd.f32 %v605, %v664
      %v667 = vxor.u32 %v666, 2147483648
      %v668 = vmul.f32 %v667, 1.442695
      %v669 = vpow.pop %v668
      %v670 = vadd.f32 %v669, 1.0
      %v671 = vrcp.pop %v670
      %v672 = vmul.f32 1.0, %v671
      %673 = vrot.lane.b32.xlu0 %v650, 64
      %v674 = vpop.permute.xlu0 %673
      %v676 = vmul.f32 %v661, %v674
      %v677 = vadd.f32 %v610, %v676
      %v678 = vtanh.pop %v677
      %v679 = vsub.f32 1.0, %v672
      %v680 = vmul.f32 %v679, %v678
      %v681 = vmul.f32 %v672, %v592
      %v682 = vadd.f32 %v680, %v681
      %s683 = smul.u32 %s596, 8
      %s684 = scalar_lea.vmem %s286, %s683
      %685 = vst.msk [vmem:[%s684] sm:$0xff] %vm339, %v682
      %s686 = ssub.s32 4, %s18
      %s687 = smul.addr %s686, 4
      %s688 = scalar_lea.vmem %s260, %s687
      %v689 = vld [vmem:[%s688] sm:$0xf]
      %v690 = vunpack.c.l.bf16 %v689
      %s691 = sadd.s32 %s686, 8
      %s692 = smul.addr %s691, 4
      %s693 = scalar_lea.vmem %s260, %s692
      %v694 = vld [vmem:[%s693] sm:$0xf]
      %v695 = vunpack.c.l.bf16 %v694
      %s696 = sadd.s32 %s686, 16
      %s697 = smul.addr %s696, 4
      %s698 = scalar_lea.vmem %s260, %s697
      %v699 = vld [vmem:[%s698] sm:$0xf]
      %v700 = vunpack.c.l.bf16 %v699
      %v701 = vpack.c.bf16 %v682, %v682
      %v703 = vsel %vm339, %v701, 0
      %705 = vmatprep.subr.bf16.mxu0 0
      %706 = vmatpush1.bf16.msra.mxu0 0
      %707 = vmatprep.subr.bf16.mxu0 0
      %708 = vmatpush1.bf16.msra.mxu0 0
      %709 = vmatprep.subr.bf16.mxu0 0
      %710 = vmatpush1.bf16.msra.mxu0 0
      %711 = vmatprep.subr.bf16.mxu0 0
      %712 = vmatpush1.bf16.msra.mxu0 0
      %713 = vmatprep.subr.bf16.mxu0 0
      %714 = vmatpush1.bf16.msra.mxu0 0
      %715 = vmatprep.subr.bf16.mxu0 0
      %716 = vmatpush1.bf16.msra.mxu0 0
      %717 = vmatprep.subr.bf16.mxu0 0
      %718 = vmatpush1.bf16.msra.mxu0 %v336
      %719 = vmatprep.subr.bf16.mxu0 0
      %720 = vmatpush1.bf16.msra.mxu0 %v335
      %721 = vmatprep.subr.bf16.mxu0 0
      %722 = vmatpush2.bf16.msra.mxu0 0
      %723 = vmatprep.subr.bf16.mxu0 0
      %724 = vmatpush2.bf16.msra.mxu0 0
      %725 = vmatprep.subr.bf16.mxu0 0
      %726 = vmatpush2.bf16.msra.mxu0 0
      %727 = vmatprep.subr.bf16.mxu0 0
      %728 = vmatpush2.bf16.msra.mxu0 0
      %729 = vmatprep.subr.bf16.mxu0 0
      %730 = vmatpush2.bf16.msra.mxu0 0
      %731 = vmatprep.subr.bf16.mxu0 0
      %732 = vmatpush2.bf16.msra.mxu0 0
      %733 = vmatprep.subr.bf16.mxu0 0
      %734 = vmatpush2.bf16.msra.mxu0 0
      %735 = vmatprep.subr.bf16.mxu0 0
      %736 = vmatpush2.bf16.msra.mxu0 0
      %737 = vmatprep.mubr.bf16.mxu0 0
      %738 = vmatmul.mubr.bf16.gmra.mxu0 %v703
      %v739 = vpop.f32.mrf.mxu0
      %v740 = vadd.f32 %v325, %v739
      %v741 = vpop.f32.mrf.mxu0
      %v742 = vpop.f32.mrf.mxu0
      %v743 = vpop.f32.mrf.mxu0
      %744 = vdwg.mxu0
      %v745 = vadd.f32 %v690, %v740
      %v746 = vxor.u32 %v745, 2147483648
      %v747 = vmul.f32 %v746, 1.442695
      %v748 = vpow.pop %v747
      %v749 = vadd.f32 %v748, 1.0
      %v750 = vrcp.pop %v749
      %v751 = vmul.f32 1.0, %v750
      %753 = vrot.lane.b32.xlu0 %v740, 96
      %v754 = vpop.permute.xlu0 %753
      %v756 = vadd.f32 %v695, %v754
      %v757 = vxor.u32 %v756, 2147483648
      %v758 = vmul.f32 %v757, 1.442695
      %v759 = vpow.pop %v758
      %v760 = vadd.f32 %v759, 1.0
      %v761 = vrcp.pop %v760
      %v762 = vmul.f32 1.0, %v761
      %763 = vrot.lane.b32.xlu0 %v740, 64
      %v764 = vpop.permute.xlu0 %763
      %v766 = vmul.f32 %v751, %v764
      %v767 = vadd.f32 %v700, %v766
      %v768 = vtanh.pop %v767
      %v769 = vsub.f32 1.0, %v762
      %v770 = vmul.f32 %v769, %v768
      %v771 = vmul.f32 %v762, %v682
      %v772 = vadd.f32 %v770, %v771
      %s773 = smul.u32 %s686, 8
      %s774 = scalar_lea.vmem %s286, %s773
      %775 = vst.msk [vmem:[%s774] sm:$0xff] %vm339, %v772
      %s776 = smul.u32 %s18, 4294967293
      %s777 = sadd.s32 %s776, 5
      %s778 = smul.addr %s777, 4
      %s779 = scalar_lea.vmem %s260, %s778
      %v780 = vld [vmem:[%s779] sm:$0xf]
      %v781 = vunpack.c.l.bf16 %v780
      %s782 = sadd.s32 %s777, 8
      %s783 = smul.addr %s782, 4
      %s784 = scalar_lea.vmem %s260, %s783
      %v785 = vld [vmem:[%s784] sm:$0xf]
      %v786 = vunpack.c.l.bf16 %v785
      %s787 = sadd.s32 %s777, 16
      %s788 = smul.addr %s787, 4
      %s789 = scalar_lea.vmem %s260, %s788
      %v790 = vld [vmem:[%s789] sm:$0xf]
      %v791 = vunpack.c.l.bf16 %v790
      %v792 = vpack.c.bf16 %v772, %v772
      %v794 = vsel %vm339, %v792, 0
      %796 = vmatprep.subr.bf16.mxu0 0
      %797 = vmatpush1.bf16.msra.mxu0 0
      %798 = vmatprep.subr.bf16.mxu0 0
      %799 = vmatpush1.bf16.msra.mxu0 0
      %800 = vmatprep.subr.bf16.mxu0 0
      %801 = vmatpush1.bf16.msra.mxu0 0
      %802 = vmatprep.subr.bf16.mxu0 0
      %803 = vmatpush1.bf16.msra.mxu0 0
      %804 = vmatprep.subr.bf16.mxu0 0
      %805 = vmatpush1.bf16.msra.mxu0 0
      %806 = vmatprep.subr.bf16.mxu0 0
      %807 = vmatpush1.bf16.msra.mxu0 0
      %808 = vmatprep.subr.bf16.mxu0 0
      %809 = vmatpush1.bf16.msra.mxu0 %v336
      %810 = vmatprep.subr.bf16.mxu0 0
      %811 = vmatpush1.bf16.msra.mxu0 %v335
      %812 = vmatprep.subr.bf16.mxu0 0
      %813 = vmatpush2.bf16.msra.mxu0 0
      %814 = vmatprep.subr.bf16.mxu0 0
      %815 = vmatpush2.bf16.msra.mxu0 0
      %816 = vmatprep.subr.bf16.mxu0 0
      %817 = vmatpush2.bf16.msra.mxu0 0
      %818 = vmatprep.subr.bf16.mxu0 0
      %819 = vmatpush2.bf16.msra.mxu0 0
      %820 = vmatprep.subr.bf16.mxu0 0
      %821 = vmatpush2.bf16.msra.mxu0 0
      %822 = vmatprep.subr.bf16.mxu0 0
      %823 = vmatpush2.bf16.msra.mxu0 0
      %824 = vmatprep.subr.bf16.mxu0 0
      %825 = vmatpush2.bf16.msra.mxu0 0
      %826 = vmatprep.subr.bf16.mxu0 0
      %827 = vmatpush2.bf16.msra.mxu0 0
      %828 = vmatprep.mubr.bf16.mxu0 0
      %829 = vmatmul.mubr.bf16.gmra.mxu0 %v794
      %v830 = vpop.f32.mrf.mxu0
      %v831 = vadd.f32 %v325, %v830
      %v832 = vpop.f32.mrf.mxu0
      %v833 = vpop.f32.mrf.mxu0
      %v834 = vpop.f32.mrf.mxu0
      %835 = vdwg.mxu0
      %v836 = vadd.f32 %v781, %v831
      %v837 = vxor.u32 %v836, 2147483648
      %v838 = vmul.f32 %v837, 1.442695
      %v839 = vpow.pop %v838
      %v840 = vadd.f32 %v839, 1.0
      %v841 = vrcp.pop %v840
      %v842 = vmul.f32 1.0, %v841
      %844 = vrot.lane.b32.xlu0 %v831, 96
      %v845 = vpop.permute.xlu0 %844
      %v847 = vadd.f32 %v786, %v845
      %v848 = vxor.u32 %v847, 2147483648
      %v849 = vmul.f32 %v848, 1.442695
      %v850 = vpow.pop %v849
      %v851 = vadd.f32 %v850, 1.0
      %v852 = vrcp.pop %v851
      %v853 = vmul.f32 1.0, %v852
      %854 = vrot.lane.b32.xlu0 %v831, 64
      %v855 = vpop.permute.xlu0 %854
      %v857 = vmul.f32 %v842, %v855
      %v858 = vadd.f32 %v791, %v857
      %v859 = vtanh.pop %v858
      %v860 = vsub.f32 1.0, %v853
      %v861 = vmul.f32 %v860, %v859
      %v862 = vmul.f32 %v853, %v772
      %v863 = vadd.f32 %v861, %v862
      %s864 = smul.u32 %s777, 8
      %s865 = scalar_lea.vmem %s286, %s864
      %866 = vst.msk [vmem:[%s865] sm:$0xff] %vm339, %v863
      %s867 = smul.u32 %s18, 4294967291
      %s868 = sadd.s32 %s867, 6
      %s869 = smul.addr %s868, 4
      %s870 = scalar_lea.vmem %s260, %s869
      %v871 = vld [vmem:[%s870] sm:$0xf]
      %v872 = vunpack.c.l.bf16 %v871
      %s873 = sadd.s32 %s868, 8
      %s874 = smul.addr %s873, 4
      %s875 = scalar_lea.vmem %s260, %s874
      %v876 = vld [vmem:[%s875] sm:$0xf]
      %v877 = vunpack.c.l.bf16 %v876
      %s878 = sadd.s32 %s868, 16
      %s879 = smul.addr %s878, 4
      %s880 = scalar_lea.vmem %s260, %s879
      %v881 = vld [vmem:[%s880] sm:$0xf]
      %v882 = vunpack.c.l.bf16 %v881
      %v883 = vpack.c.bf16 %v863, %v863
      %v885 = vsel %vm339, %v883, 0
      %887 = vmatprep.subr.bf16.mxu0 0
      %888 = vmatpush1.bf16.msra.mxu0 0
      %889 = vmatprep.subr.bf16.mxu0 0
      %890 = vmatpush1.bf16.msra.mxu0 0
      %891 = vmatprep.subr.bf16.mxu0 0
      %892 = vmatpush1.bf16.msra.mxu0 0
      %893 = vmatprep.subr.bf16.mxu0 0
      %894 = vmatpush1.bf16.msra.mxu0 0
      %895 = vmatprep.subr.bf16.mxu0 0
      %896 = vmatpush1.bf16.msra.mxu0 0
      %897 = vmatprep.subr.bf16.mxu0 0
      %898 = vmatpush1.bf16.msra.mxu0 0
      %899 = vmatprep.subr.bf16.mxu0 0
      %900 = vmatpush1.bf16.msra.mxu0 %v336
      %901 = vmatprep.subr.bf16.mxu0 0
      %902 = vmatpush1.bf16.msra.mxu0 %v335
      %903 = vmatprep.subr.bf16.mxu0 0
      %904 = vmatpush2.bf16.msra.mxu0 0
      %905 = vmatprep.subr.bf16.mxu0 0
      %906 = vmatpush2.bf16.msra.mxu0 0
      %907 = vmatprep.subr.bf16.mxu0 0
      %908 = vmatpush2.bf16.msra.mxu0 0
      %909 = vmatprep.subr.bf16.mxu0 0
      %910 = vmatpush2.bf16.msra.mxu0 0
      %911 = vmatprep.subr.bf16.mxu0 0
      %912 = vmatpush2.bf16.msra.mxu0 0
      %913 = vmatprep.subr.bf16.mxu0 0
      %914 = vmatpush2.bf16.msra.mxu0 0
      %915 = vmatprep.subr.bf16.mxu0 0
      %916 = vmatpush2.bf16.msra.mxu0 0
      %917 = vmatprep.subr.bf16.mxu0 0
      %918 = vmatpush2.bf16.msra.mxu0 0
      %919 = vmatprep.mubr.bf16.mxu0 0
      %920 = vmatmul.mubr.bf16.gmra.mxu0 %v885
      %v921 = vpop.f32.mrf.mxu0
      %v922 = vadd.f32 %v325, %v921
      %v923 = vpop.f32.mrf.mxu0
      %v924 = vpop.f32.mrf.mxu0
      %v925 = vpop.f32.mrf.mxu0
      %926 = vdwg.mxu0
      %v927 = vadd.f32 %v872, %v922
      %v928 = vxor.u32 %v927, 2147483648
      %v929 = vmul.f32 %v928, 1.442695
      %v930 = vpow.pop %v929
      %v931 = vadd.f32 %v930, 1.0
      %v932 = vrcp.pop %v931
      %v933 = vmul.f32 1.0, %v932
      %935 = vrot.lane.b32.xlu0 %v922, 96
      %v936 = vpop.permute.xlu0 %935
      %v938 = vadd.f32 %v877, %v936
      %v939 = vxor.u32 %v938, 2147483648
      %v940 = vmul.f32 %v939, 1.442695
      %v941 = vpow.pop %v940
      %v942 = vadd.f32 %v941, 1.0
      %v943 = vrcp.pop %v942
      %v944 = vmul.f32 1.0, %v943
      %945 = vrot.lane.b32.xlu0 %v922, 64
      %v946 = vpop.permute.xlu0 %945
      %v948 = vmul.f32 %v933, %v946
      %v949 = vadd.f32 %v882, %v948
      %v950 = vtanh.pop %v949
      %v951 = vsub.f32 1.0, %v944
      %v952 = vmul.f32 %v951, %v950
      %v953 = vmul.f32 %v944, %v863
      %v954 = vadd.f32 %v952, %v953
      %s955 = smul.u32 %s868, 8
      %s956 = scalar_lea.vmem %s286, %s955
      %957 = vst.msk [vmem:[%s956] sm:$0xff] %vm339, %v954
      %s958 = smul.u32 %s18, 4294967289
      %s959 = sadd.s32 %s958, 7
      %s960 = smul.addr %s959, 4
      %s961 = scalar_lea.vmem %s260, %s960
      %v962 = vld [vmem:[%s961] sm:$0xf]
      %v963 = vunpack.c.l.bf16 %v962
      %s964 = sadd.s32 %s959, 8
      %s965 = smul.addr %s964, 4
      %s966 = scalar_lea.vmem %s260, %s965
      %v967 = vld [vmem:[%s966] sm:$0xf]
      %v968 = vunpack.c.l.bf16 %v967
      %s969 = sadd.s32 %s959, 16
      %s970 = smul.addr %s969, 4
      %s971 = scalar_lea.vmem %s260, %s970
      %v972 = vld [vmem:[%s971] sm:$0xf]
      %v973 = vunpack.c.l.bf16 %v972
      %v974 = vpack.c.bf16 %v954, %v954
      %v976 = vsel %vm339, %v974, 0
      %978 = vmatprep.subr.bf16.mxu0 0
      %979 = vmatpush1.bf16.msra.mxu0 0
      %980 = vmatprep.subr.bf16.mxu0 0
      %981 = vmatpush1.bf16.msra.mxu0 0
      %982 = vmatprep.subr.bf16.mxu0 0
      %983 = vmatpush1.bf16.msra.mxu0 0
      %984 = vmatprep.subr.bf16.mxu0 0
      %985 = vmatpush1.bf16.msra.mxu0 0
      %986 = vmatprep.subr.bf16.mxu0 0
      %987 = vmatpush1.bf16.msra.mxu0 0
      %988 = vmatprep.subr.bf16.mxu0 0
      %989 = vmatpush1.bf16.msra.mxu0 0
      %990 = vmatprep.subr.bf16.mxu0 0
      %991 = vmatpush1.bf16.msra.mxu0 %v336
      %992 = vmatprep.subr.bf16.mxu0 0
      %993 = vmatpush1.bf16.msra.mxu0 %v335
      %994 = vmatprep.subr.bf16.mxu0 0
      %995 = vmatpush2.bf16.msra.mxu0 0
      %996 = vmatprep.subr.bf16.mxu0 0
      %997 = vmatpush2.bf16.msra.mxu0 0
      %998 = vmatprep.subr.bf16.mxu0 0
      %999 = vmatpush2.bf16.msra.mxu0 0
      %1000 = vmatprep.subr.bf16.mxu0 0
      %1001 = vmatpush2.bf16.msra.mxu0 0
      %1002 = vmatprep.subr.bf16.mxu0 0
      %1003 = vmatpush2.bf16.msra.mxu0 0
      %1004 = vmatprep.subr.bf16.mxu0 0
      %1005 = vmatpush2.bf16.msra.mxu0 0
      %1006 = vmatprep.subr.bf16.mxu0 0
      %1007 = vmatpush2.bf16.msra.mxu0 0
      %1008 = vmatprep.subr.bf16.mxu0 0
      %1009 = vmatpush2.bf16.msra.mxu0 0
      %1010 = vmatprep.mubr.bf16.mxu0 0
      %1011 = vmatmul.mubr.bf16.gmra.mxu0 %v976
      %v1012 = vpop.f32.mrf.mxu0
      %v1013 = vadd.f32 %v325, %v1012
      %v1014 = vpop.f32.mrf.mxu0
      %v1015 = vpop.f32.mrf.mxu0
      %v1016 = vpop.f32.mrf.mxu0
      %1017 = vdwg.mxu0
      %v1018 = vadd.f32 %v963, %v1013
      %v1019 = vxor.u32 %v1018, 2147483648
      %v1020 = vmul.f32 %v1019, 1.442695
      %v1021 = vpow.pop %v1020
      %v1022 = vadd.f32 %v1021, 1.0
      %v1023 = vrcp.pop %v1022
      %v1024 = vmul.f32 1.0, %v1023
      %1026 = vrot.lane.b32.xlu0 %v1013, 96
      %v1027 = vpop.permute.xlu0 %1026
      %v1029 = vadd.f32 %v968, %v1027
      %v1030 = vxor.u32 %v1029, 2147483648
      %v1031 = vmul.f32 %v1030, 1.442695
      %v1032 = vpow.pop %v1031
      %v1033 = vadd.f32 %v1032, 1.0
      %v1034 = vrcp.pop %v1033
      %v1035 = vmul.f32 1.0, %v1034
      %1036 = vrot.lane.b32.xlu0 %v1013, 64
      %v1037 = vpop.permute.xlu0 %1036
      %v1039 = vmul.f32 %v1024, %v1037
      %v1040 = vadd.f32 %v973, %v1039
      %v1041 = vtanh.pop %v1040
      %v1042 = vsub.f32 1.0, %v1035
      %v1043 = vmul.f32 %v1042, %v1041
      %v1044 = vmul.f32 %v1035, %v954
      %v1045 = vadd.f32 %v1043, %v1044
      %s1046 = smul.u32 %s959, 8
      %s1047 = scalar_lea.vmem %s286, %s1046
      %1048 = vst.msk [vmem:[%s1047] sm:$0xff] %vm339, %v1045
      %1049 = vst.msk [vmem:[#allocation2] sm:$0xff] %vm339, %v1045
      %s1050 = smul.u32 %s19, 2
      %s1051 = ssub.s32 0, %s1050
      %s1052 = smul.u32 %s18, %s1051
      %s1053 = sadd.s32 %s19, %s1052
      %s1054 = smul.u32 8, %s1053
      %p1055 = scmp.lt.s32.totalorder %s18, 1
      %s1056 = scalar_select %p1055, %s18, 1
      %p1057 = scmp.lt.s32.totalorder %s1054, 7
      %s1058 = scalar_select %p1057, %s1054, 7
      %s1059 = smul.addr %s1056, 8
      %s1060 = sadd.s32 %s1058, %s1059
      %s1061 = smul.addr %s1060, 8
      %s1062 = scalar_lea.vmem %s3, %s1061
      // Predicated region
      $region37: #{bidirectional_gru_forward.3} parent=31 // pred_check
        %p1063 = pneg %p142
      $region38: #{bidirectional_gru_forward.3} parent=31 // pred_check_branch
        %1065 = sbr.rel (%p1063) target = $region40
      $region39: #{bidirectional_gru_forward.3} parent=31 // pred_region
        %s1066 = smul.u32 %s19, 2
        %s1067 = ssub.s32 0, %s1066
        %s1068 = smul.u32 %s18, %s1067
        %s1069 = sadd.s32 %s19, %s1068
        %s1070 = smul.u32 8, %s1069
      $region40: #{bidirectional_gru_forward.3} parent=31 // pred_fallthru
        _
    $region32: #{bidirectional_gru_forward.3} parent=5 // pred_fallthru
      _
    %p1071 = scmp.le.s32.totalorder 2, %s9
    // Predicated region
    $region41: #{bidirectional_gru_forward.3} parent=5 // pred_check
      %p1072 = pneg %p1071
    $region42: #{bidirectional_gru_forward.3} parent=5 // pred_check_branch
      %1074 = sbr.rel (%p1072) target = $region44
    $region43: #{bidirectional_gru_forward.3} parent=5 // pred_region
      %s1075 = ssub.s32 %s9, 2
      // Predicated region
      $region45: #{bidirectional_gru_forward.3} parent=43 // pred_check
        %p1076 = pneg %p148
      $region46: #{bidirectional_gru_forward.3} parent=43 // pred_check_branch
        %1078 = sbr.rel (%p1076) target = $region48
      $region47: #{bidirectional_gru_forward.3} parent=43 // pred_region
        %s1079 = smul.u32 %s21, 2
        %s1080 = ssub.s32 0, %s1079
        %s1081 = smul.u32 %s20, %s1080
        %s1082 = sadd.s32 %s21, %s1081
        %s1083 = smul.u32 8, %s1082
        %p1084 = scmp.lt.s32.totalorder %s20, 1
        %s1085 = scalar_select %p1084, %s20, 1
        %p1086 = scmp.lt.s32.totalorder %s1083, 7
        %s1087 = scalar_select %p1086, %s1083, 7
        %s1088 = smul.addr %s1085, 8
        %s1089 = sadd.s32 %s1087, %s1088
        %s1090 = smul.addr %s1089, 8
        %s1091 = scalar_lea.vmem %s3, %s1090
      $region48: #{bidirectional_gru_forward.3} parent=43 // pred_fallthru
        _
    $region44: #{bidirectional_gru_forward.3} parent=5 // pred_fallthru
      _
  $region6: #{bidirectional_gru_forward.3} parent=0 // loop_footer
    %s13 = sadd.s32 1, %s9
  $region7: #{bidirectional_gru_forward.3} parent=0 // loop_footer_branch
    %8 = sbr.rel target = $region3
  $region8: #{bidirectional_gru_forward.3} parent=0 // loop_exit
    _

// kernel: bidirectional_gru_forward.2
$region0: #{bidirectional_gru_forward.2}
  #allocation0 [shape = 'u32[]', space=smem, size = 0x4, offset = 0x4, fixed_abs, tag = 'smem constant byte address 0x4 - core index']
  #allocation1 [shape = 'u32[144,128]{1,0:T(1,128)}', space=vmem, size = 0x12000, scoped, tag = 'internal scratch']
  %s0 = inlined_call_operand.vmem [shape: f32[8,8,64], index: 0, kind: input, shape index: {}]
  %s1 = inlined_call_operand.vmem [shape: f32[1,64], index: 1, kind: input, shape index: {}]
  %s2 = inlined_call_operand.vmem [shape: f32[1,64], index: 2, kind: input, shape index: {}]
  %s3 = inlined_call_operand.vmem [shape: bf16[64,192], index: 3, kind: input, shape index: {}]
  %s4 = inlined_call_operand.vmem [shape: f32[1,192], index: 4, kind: input, shape index: {}]
  %s5 = inlined_call_operand.vmem [shape: bf16[2,3,8,8,32], index: 5, kind: output, shape index: {}]
  %s6 = sld [smem:[#allocation0]]
  $region30: #{bidirectional_gru_forward.2} parent=0
    _
  %s8 = ssub.s32 1, %s6
  %s9 = scalar_select 0, %s8, %s6
  // Predicated region
  $region2: #{bidirectional_gru_forward.2} parent=0 // pred_check
    _
  $region3: #{bidirectional_gru_forward.2} parent=0 // pred_check_branch
    %11 = sbr.rel (0) target = $region5
  $region4: #{bidirectional_gru_forward.2} parent=0 // pred_region
    _
  $region5: #{bidirectional_gru_forward.2} parent=0 // pred_fallthru
    _
  // Predicated region
  $region6: #{bidirectional_gru_forward.2} parent=0 // pred_check
    _
  $region7: #{bidirectional_gru_forward.2} parent=0 // pred_check_branch
    %13 = sbr.rel (0) target = $region9
  $region8: #{bidirectional_gru_forward.2} parent=0 // pred_region
    _
  $region9: #{bidirectional_gru_forward.2} parent=0 // pred_fallthru
    _
  // Predicated region
  $region10: #{bidirectional_gru_forward.2} parent=0 // pred_check
    _
  $region11: #{bidirectional_gru_forward.2} parent=0 // pred_check_branch
    %15 = sbr.rel (0) target = $region13
  $region12: #{bidirectional_gru_forward.2} parent=0 // pred_region
    _
  $region13: #{bidirectional_gru_forward.2} parent=0 // pred_fallthru
    _
  // Predicated region
  $region14: #{bidirectional_gru_forward.2} parent=0 // pred_check
    _
  $region15: #{bidirectional_gru_forward.2} parent=0 // pred_check_branch
    %17 = sbr.rel (0) target = $region17
  $region16: #{bidirectional_gru_forward.2} parent=0 // pred_region
    _
  $region17: #{bidirectional_gru_forward.2} parent=0 // pred_fallthru
    _
  // Predicated region
  $region18: #{bidirectional_gru_forward.2} parent=0 // pred_check
    _
  $region19: #{bidirectional_gru_forward.2} parent=0 // pred_check_branch
    %19 = sbr.rel (0) target = $region21
  $region20: #{bidirectional_gru_forward.2} parent=0 // pred_region
    _
  $region21: #{bidirectional_gru_forward.2} parent=0 // pred_fallthru
    _
  %v21 = vld [vmem:[%s0] sm:$0xff]
  %v22 = vld [vmem:[%s0 + $0x8] sm:$0xff]
  %v23 = vld [vmem:[%s0 + $0x10] sm:$0xff]
  %v24 = vld [vmem:[%s0 + $0x18] sm:$0xff]
  %v25 = vld [vmem:[%s0 + $0x20] sm:$0xff]
  %v26 = vld [vmem:[%s0 + $0x28] sm:$0xff]
  %v27 = vld [vmem:[%s0 + $0x30] sm:$0xff]
  %v28 = vld [vmem:[%s0 + $0x38] sm:$0xff]
  %vm29 = vcmask 523264
  %v30 = vsel %vm29, %v21, 0.0
  %31 = vadd.xlane.f32.xlu0 %v30
  %v32 = vpop.xlane.xlu0 %31
  %v33 = vsel %vm29, %v22, 0.0
  %34 = vadd.xlane.f32.xlu0 %v33
  %v35 = vpop.xlane.xlu0 %34
  %v36 = vsel %vm29, %v23, 0.0
  %37 = vadd.xlane.f32.xlu0 %v36
  %v38 = vpop.xlane.xlu0 %37
  %v39 = vsel %vm29, %v24, 0.0
  %40 = vadd.xlane.f32.xlu0 %v39
  %v41 = vpop.xlane.xlu0 %40
  %v42 = vsel %vm29, %v25, 0.0
  %43 = vadd.xlane.f32.xlu0 %v42
  %v44 = vpop.xlane.xlu0 %43
  %v45 = vsel %vm29, %v26, 0.0
  %46 = vadd.xlane.f32.xlu0 %v45
  %v47 = vpop.xlane.xlu0 %46
  %v48 = vsel %vm29, %v27, 0.0
  %49 = vadd.xlane.f32.xlu0 %v48
  %v50 = vpop.xlane.xlu0 %49
  %v51 = vsel %vm29, %v28, 0.0
  %52 = vadd.xlane.f32.xlu0 %v51
  %v53 = vpop.xlane.xlu0 %52
  %v54 = vrcp.pop 64.0
  %v55 = vmul.f32 %v32, %v54
  %v56 = vmul.f32 %v35, %v54
  %v57 = vmul.f32 %v38, %v54
  %v58 = vmul.f32 %v41, %v54
  %v59 = vmul.f32 %v44, %v54
  %v60 = vmul.f32 %v47, %v54
  %v61 = vmul.f32 %v50, %v54
  %v62 = vmul.f32 %v53, %v54
  %v63 = vsub.f32 %v21, %v55
  %v64 = vsub.f32 %v22, %v56
  %v65 = vsub.f32 %v23, %v57
  %v66 = vsub.f32 %v24, %v58
  %v67 = vsub.f32 %v25, %v59
  %v68 = vsub.f32 %v26, %v60
  %v69 = vsub.f32 %v27, %v61
  %v70 = vsub.f32 %v28, %v62
  %v71 = vmul.f32 %v63, %v63
  %v72 = vmul.f32 %v64, %v64
  %v73 = vmul.f32 %v65, %v65
  %v74 = vmul.f32 %v66, %v66
  %v75 = vmul.f32 %v67, %v67
  %v76 = vmul.f32 %v68, %v68
  %v77 = vmul.f32 %v69, %v69
  %v78 = vmul.f32 %v70, %v70
  %v79 = vsel %vm29, %v71, 0.0
  %80 = vadd.xlane.f32.xlu0 %v79
  %v81 = vpop.xlane.xlu0 %80
  %v82 = vsel %vm29, %v72, 0.0
  %83 = vadd.xlane.f32.xlu0 %v82
  %v84 = vpop.xlane.xlu0 %83
  %v85 = vsel %vm29, %v73, 0.0
  %86 = vadd.xlane.f32.xlu0 %v85
  %v87 = vpop.xlane.xlu0 %86
  %v88 = vsel %vm29, %v74, 0.0
  %89 = vadd.xlane.f32.xlu0 %v88
  %v90 = vpop.xlane.xlu0 %89
  %v91 = vsel %vm29, %v75, 0.0
  %92 = vadd.xlane.f32.xlu0 %v91
  %v93 = vpop.xlane.xlu0 %92
  %v94 = vsel %vm29, %v76, 0.0
  %95 = vadd.xlane.f32.xlu0 %v94
  %v96 = vpop.xlane.xlu0 %95
  %v97 = vsel %vm29, %v77, 0.0
  %98 = vadd.xlane.f32.xlu0 %v97
  %v99 = vpop.xlane.xlu0 %98
  %v100 = vsel %vm29, %v78, 0.0
  %101 = vadd.xlane.f32.xlu0 %v100
  %v102 = vpop.xlane.xlu0 %101
  %v103 = vmul.f32 %v81, %v54
  %v104 = vmul.f32 %v84, %v54
  %v105 = vmul.f32 %v87, %v54
  %v106 = vmul.f32 %v90, %v54
  %v107 = vmul.f32 %v93, %v54
  %v108 = vmul.f32 %v96, %v54
  %v109 = vmul.f32 %v99, %v54
  %v110 = vmul.f32 %v102, %v54
  %v111 = vadd.f32 %v103, 1e-05
  %v112 = vadd.f32 %v104, 1e-05
  %v113 = vadd.f32 %v105, 1e-05
  %v114 = vadd.f32 %v106, 1e-05
  %v115 = vadd.f32 %v107, 1e-05
  %v116 = vadd.f32 %v108, 1e-05
  %v117 = vadd.f32 %v109, 1e-05
  %v118 = vadd.f32 %v110, 1e-05
  %v119 = vrsqrt.pop %v111
  %v120 = vrsqrt.pop %v112
  %v121 = vrsqrt.pop %v113
  %v122 = vrsqrt.pop %v114
  %v123 = vrsqrt.pop %v115
  %v124 = vrsqrt.pop %v116
  %v125 = vrsqrt.pop %v117
  %v126 = vrsqrt.pop %v118
  %v127 = vmul.f32 %v63, %v119
  %v128 = vmul.f32 %v64, %v120
  %v129 = vmul.f32 %v65, %v121
  %v130 = vmul.f32 %v66, %v122
  %v131 = vmul.f32 %v67, %v123
  %v132 = vmul.f32 %v68, %v124
  %v133 = vmul.f32 %v69, %v125
  %v134 = vmul.f32 %v70, %v126
  %v135 = vld [vmem:[%s1] sm:$0x1]
  %v137 = vlaneseq
  %v138 = vshrl.u32 %v137, 7
  %v139 = vsub.s32 0, %v138
  %v140 = vrot.slane %v135, %v139
  %v142 = vmul.f32 %v127, %v140
  %v143 = vmul.f32 %v128, %v140
  %v144 = vmul.f32 %v129, %v140
  %v145 = vmul.f32 %v130, %v140
  %v146 = vmul.f32 %v131, %v140
  %v147 = vmul.f32 %v132, %v140
  %v148 = vmul.f32 %v133, %v140
  %v149 = vmul.f32 %v134, %v140
  %v150 = vld [vmem:[%s2] sm:$0x1]
  %v152 = vlaneseq
  %v153 = vshrl.u32 %v152, 7
  %v154 = vsub.s32 0, %v153
  %v155 = vrot.slane %v150, %v154
  %v157 = vadd.f32 %v142, %v155
  %v158 = vadd.f32 %v143, %v155
  %v159 = vadd.f32 %v144, %v155
  %v160 = vadd.f32 %v145, %v155
  %v161 = vadd.f32 %v146, %v155
  %v162 = vadd.f32 %v147, %v155
  %v163 = vadd.f32 %v148, %v155
  %v164 = vadd.f32 %v149, %v155
  %v165 = vmul.f32 %v157, 0.5
  %v166 = vmul.f32 %v158, 0.5
  %v167 = vmul.f32 %v159, 0.5
  %v168 = vmul.f32 %v160, 0.5
  %v169 = vmul.f32 %v161, 0.5
  %v170 = vmul.f32 %v162, 0.5
  %v171 = vmul.f32 %v163, 0.5
  %v172 = vmul.f32 %v164, 0.5
  %v173 = vmul.f32 %v157, 0.70710677
  %v174 = vmul.f32 %v158, 0.70710677
  %v175 = vmul.f32 %v159, 0.70710677
  %v176 = vmul.f32 %v160, 0.70710677
  %v177 = vmul.f32 %v161, 0.70710677
  %v178 = vmul.f32 %v162, 0.70710677
  %v179 = vmul.f32 %v163, 0.70710677
  %v180 = vmul.f32 %v164, 0.70710677
  %v181 = verf.f32.pop %v173
  %v182 = verf.f32.pop %v174
  %v183 = verf.f32.pop %v175
  %v184 = verf.f32.pop %v176
  %v185 = verf.f32.pop %v177
  %v186 = verf.f32.pop %v178
  %v187 = verf.f32.pop %v179
  %v188 = verf.f32.pop %v180
  %v189 = vadd.f32 %v181, 1.0
  %v190 = vadd.f32 %v182, 1.0
  %v191 = vadd.f32 %v183, 1.0
  %v192 = vadd.f32 %v184, 1.0
  %v193 = vadd.f32 %v185, 1.0
  %v194 = vadd.f32 %v186, 1.0
  %v195 = vadd.f32 %v187, 1.0
  %v196 = vadd.f32 %v188, 1.0
  %v197 = vmul.f32 %v165, %v189
  %v198 = vmul.f32 %v166, %v190
  %v199 = vmul.f32 %v167, %v191
  %v200 = vmul.f32 %v168, %v192
  %v201 = vmul.f32 %v169, %v193
  %v202 = vmul.f32 %v170, %v194
  %v203 = vmul.f32 %v171, %v195
  %v204 = vmul.f32 %v172, %v196
  %v205 = vpack.c.bf16 %v198, %v197
  %v206 = vpack.c.bf16 %v200, %v199
  %v207 = vpack.c.bf16 %v202, %v201
  %v208 = vpack.c.bf16 %v204, %v203
  %v209 = vld [vmem:[%s3] sm:$0xff]
  %v210 = vld [vmem:[%s3 + $0x8] sm:$0xff]
  %v211 = vld [vmem:[%s3 + $0x10] sm:$0xff]
  %v212 = vld [vmem:[%s3 + $0x18] sm:$0xff]
  %v213 = vld [vmem:[%s3 + $0x20] sm:$0xff]
  %v214 = vld [vmem:[%s3 + $0x28] sm:$0xff]
  %v215 = vld [vmem:[%s3 + $0x30] sm:$0xff]
  %v216 = vld [vmem:[%s3 + $0x38] sm:$0xff]
  %v217 = vld [vmem:[%s4] sm:$0x3]
  %v219 = vlaneseq
  %v220 = vshrl.u32 %v219, 7
  %v221 = vsub.s32 0, %v220
  %v222 = vrot.slane %v217, %v221
  %v223 = vlaneseq
  %v224 = vshrl.u32 %v223, 7
  %v225 = vsub.s32 1, %v224
  %v226 = vrot.slane %v217, %v225
  %v237 = vunpack.c.l.b16 %v209
  %v238 = vunpack.c.h.b16 %v209
  %v239 = vunpack.c.l.b16 %v210
  %v240 = vunpack.c.h.b16 %v210
  %v241 = vunpack.c.l.b16 %v211
  %v242 = vunpack.c.h.b16 %v211
  %v243 = vunpack.c.l.b16 %v212
  %v244 = vunpack.c.h.b16 %v212
  %v245 = vunpack.c.l.b16 %v213
  %v246 = vunpack.c.h.b16 %v213
  %v247 = vunpack.c.l.b16 %v214
  %v248 = vunpack.c.h.b16 %v214
  %v249 = vunpack.c.l.b16 %v215
  %v250 = vunpack.c.h.b16 %v215
  %v251 = vunpack.c.l.b16 %v216
  %v252 = vunpack.c.h.b16 %v216
  %v253 = vpack.c.b16 %v239, %v237
  %v254 = vpack.c.b16 %v240, %v238
  %v255 = vpack.c.b16 %v243, %v241
  %v256 = vpack.c.b16 %v244, %v242
  %v257 = vpack.c.b16 %v247, %v245
  %v258 = vpack.c.b16 %v248, %v246
  %v259 = vpack.c.b16 %v251, %v249
  %v260 = vpack.c.b16 %v252, %v250
  %v270 = vsel %vm29, %v205, 0
  %v273 = vsel %vm29, %v206, 0
  %v276 = vsel %vm29, %v207, 0
  %v279 = vsel %vm29, %v208, 0
  %281 = vmatprep.subr.bf16.mxu0 0
  %282 = vmatpush1.bf16.msra.mxu0 0
  %283 = vmatprep.subr.bf16.mxu0 0
  %284 = vmatpush1.bf16.msra.mxu0 0
  %285 = vmatprep.subr.bf16.mxu0 0
  %286 = vmatpush1.bf16.msra.mxu0 0
  %287 = vmatprep.subr.bf16.mxu0 0
  %288 = vmatpush1.bf16.msra.mxu0 0
  %289 = vmatprep.subr.bf16.mxu0 %v260
  %290 = vmatpush1.bf16.msra.mxu0 %v259
  %291 = vmatprep.subr.bf16.mxu0 %v258
  %292 = vmatpush1.bf16.msra.mxu0 %v257
  %293 = vmatprep.subr.bf16.mxu0 %v256
  %294 = vmatpush1.bf16.msra.mxu0 %v255
  %295 = vmatprep.subr.bf16.mxu0 %v254
  %296 = vmatpush1.bf16.msra.mxu0 %v253
  %297 = vmatprep.subr.bf16.mxu0 0
  %298 = vmatpush2.bf16.msra.mxu0 0
  %299 = vmatprep.subr.bf16.mxu0 0
  %300 = vmatpush2.bf16.msra.mxu0 0
  %301 = vmatprep.subr.bf16.mxu0 0
  %302 = vmatpush2.bf16.msra.mxu0 0
  %303 = vmatprep.subr.bf16.mxu0 0
  %304 = vmatpush2.bf16.msra.mxu0 0
  %305 = vmatprep.subr.bf16.mxu0 0
  %306 = vmatpush2.bf16.msra.mxu0 0
  %307 = vmatprep.subr.bf16.mxu0 0
  %308 = vmatpush2.bf16.msra.mxu0 0
  %309 = vmatprep.subr.bf16.mxu0 0
  %310 = vmatpush2.bf16.msra.mxu0 0
  %311 = vmatprep.subr.bf16.mxu0 0
  %312 = vmatpush2.bf16.msra.mxu0 0
  %313 = vmatprep.mubr.bf16.mxu0 0
  %314 = vmatmul.mubr.bf16.gmra.mxu0 %v270
  %v315 = vpop.f32.mrf.mxu0
  %v316 = vadd.f32 %v222, %v315
  %v317 = vpop.f32.mrf.mxu0
  %v318 = vadd.f32 %v226, %v317
  %v319 = vpop.f32.mrf.mxu0
  %v320 = vadd.f32 %v222, %v319
  %v321 = vpop.f32.mrf.mxu0
  %v322 = vadd.f32 %v226, %v321
  %323 = vmatprep.mubr.bf16.mxu0 0
  %324 = vmatmul.mubr.bf16.gmra.mxu0 %v273
  %v325 = vpop.f32.mrf.mxu0
  %v326 = vadd.f32 %v222, %v325
  %v327 = vpop.f32.mrf.mxu0
  %v328 = vadd.f32 %v226, %v327
  %v329 = vpop.f32.mrf.mxu0
  %v330 = vadd.f32 %v222, %v329
  %v331 = vpop.f32.mrf.mxu0
  %v332 = vadd.f32 %v226, %v331
  %333 = vmatprep.mubr.bf16.mxu0 0
  %334 = vmatmul.mubr.bf16.gmra.mxu0 %v276
  %v335 = vpop.f32.mrf.mxu0
  %v336 = vadd.f32 %v222, %v335
  %v337 = vpop.f32.mrf.mxu0
  %v338 = vadd.f32 %v226, %v337
  %v339 = vpop.f32.mrf.mxu0
  %v340 = vadd.f32 %v222, %v339
  %v341 = vpop.f32.mrf.mxu0
  %v342 = vadd.f32 %v226, %v341
  %343 = vmatprep.mubr.bf16.mxu0 0
  %344 = vmatmul.mubr.bf16.gmra.mxu0 %v279
  %v345 = vpop.f32.mrf.mxu0
  %v346 = vadd.f32 %v222, %v345
  %v347 = vpop.f32.mrf.mxu0
  %v348 = vadd.f32 %v226, %v347
  %v349 = vpop.f32.mrf.mxu0
  %v350 = vadd.f32 %v222, %v349
  %v351 = vpop.f32.mrf.mxu0
  %v352 = vadd.f32 %v226, %v351
  %353 = vdwg.mxu0
  %v354 = vpack.c.bf16 %v316, %v316
  %v355 = vpack.c.bf16 %v320, %v320
  %v356 = vpack.c.bf16 %v326, %v326
  %v357 = vpack.c.bf16 %v330, %v330
  %v358 = vpack.c.bf16 %v336, %v336
  %v359 = vpack.c.bf16 %v340, %v340
  %v360 = vpack.c.bf16 %v346, %v346
  %v361 = vpack.c.bf16 %v350, %v350
  %vm362 = vcmask 257024
  %363 = vst.msk [vmem:[%s5] sm:$0xf] %vm362, %v354
  %364 = vst.msk [vmem:[%s5 + $0x4] sm:$0xf] %vm362, %v355
  %365 = vst.msk [vmem:[%s5 + $0x8] sm:$0xf] %vm362, %v356
  %366 = vst.msk [vmem:[%s5 + $0xc] sm:$0xf] %vm362, %v357
  %367 = vst.msk [vmem:[%s5 + $0x10] sm:$0xf] %vm362, %v358
  %368 = vst.msk [vmem:[%s5 + $0x14] sm:$0xf] %vm362, %v359
  %369 = vst.msk [vmem:[%s5 + $0x18] sm:$0xf] %vm362, %v360
  %370 = vst.msk [vmem:[%s5 + $0x1c] sm:$0xf] %vm362, %v361
  %v379 = vunpack.c.l.b16 %v354
  %v380 = vunpack.c.l.b16 %v355
  %v381 = vunpack.c.l.b16 %v356
  %v382 = vunpack.c.l.b16 %v357
  %v383 = vunpack.c.l.b16 %v358
  %v384 = vunpack.c.l.b16 %v359
  %v385 = vunpack.c.l.b16 %v360
  %v386 = vunpack.c.l.b16 %v361
  %v387 = vpack.c.b16 %v379, %v379
  %v388 = vpack.c.b16 %v380, %v380
  %v389 = vpack.c.b16 %v381, %v381
  %v390 = vpack.c.b16 %v382, %v382
  %v391 = vpack.c.b16 %v383, %v383
  %v392 = vpack.c.b16 %v384, %v384
  %v393 = vpack.c.b16 %v385, %v385
  %v394 = vpack.c.b16 %v386, %v386
  %395 = vrot.lane.b32.xlu0 %v387, 96
  %v396 = vpop.permute.xlu0 %395
  %397 = vrot.lane.b32.xlu0 %v388, 96
  %v398 = vpop.permute.xlu0 %397
  %399 = vrot.lane.b32.xlu0 %v389, 96
  %v400 = vpop.permute.xlu0 %399
  %401 = vrot.lane.b32.xlu0 %v390, 96
  %v402 = vpop.permute.xlu0 %401
  %403 = vrot.lane.b32.xlu0 %v391, 96
  %v404 = vpop.permute.xlu0 %403
  %405 = vrot.lane.b32.xlu0 %v392, 96
  %v406 = vpop.permute.xlu0 %405
  %407 = vrot.lane.b32.xlu0 %v393, 96
  %v408 = vpop.permute.xlu0 %407
  %409 = vrot.lane.b32.xlu0 %v394, 96
  %v410 = vpop.permute.xlu0 %409
  %s419 = scalar_lea.vmem %s5, 32
  %420 = vst.msk [vmem:[%s419] sm:$0xf] %vm362, %v396
  %421 = vst.msk [vmem:[%s419 + $0x4] sm:$0xf] %vm362, %v398
  %422 = vst.msk [vmem:[%s419 + $0x8] sm:$0xf] %vm362, %v400
  %423 = vst.msk [vmem:[%s419 + $0xc] sm:$0xf] %vm362, %v402
  %424 = vst.msk [vmem:[%s419 + $0x10] sm:$0xf] %vm362, %v404
  %425 = vst.msk [vmem:[%s419 + $0x14] sm:$0xf] %vm362, %v406
  %426 = vst.msk [vmem:[%s419 + $0x18] sm:$0xf] %vm362, %v408
  %427 = vst.msk [vmem:[%s419 + $0x1c] sm:$0xf] %vm362, %v410
  %428 = vrot.lane.b32.xlu0 %v387, 64
  %v429 = vpop.permute.xlu0 %428
  %430 = vrot.lane.b32.xlu0 %v388, 64
  %v431 = vpop.permute.xlu0 %430
  %432 = vrot.lane.b32.xlu0 %v389, 64
  %v433 = vpop.permute.xlu0 %432
  %434 = vrot.lane.b32.xlu0 %v390, 64
  %v435 = vpop.permute.xlu0 %434
  %436 = vrot.lane.b32.xlu0 %v391, 64
  %v437 = vpop.permute.xlu0 %436
  %438 = vrot.lane.b32.xlu0 %v392, 64
  %v439 = vpop.permute.xlu0 %438
  %440 = vrot.lane.b32.xlu0 %v393, 64
  %v441 = vpop.permute.xlu0 %440
  %442 = vrot.lane.b32.xlu0 %v394, 64
  %v443 = vpop.permute.xlu0 %442
  %s452 = scalar_lea.vmem %s5, 64
  %453 = vst.msk [vmem:[%s452] sm:$0xf] %vm362, %v429
  %454 = vst.msk [vmem:[%s452 + $0x4] sm:$0xf] %vm362, %v431
  %455 = vst.msk [vmem:[%s452 + $0x8] sm:$0xf] %vm362, %v433
  %456 = vst.msk [vmem:[%s452 + $0xc] sm:$0xf] %vm362, %v435
  %457 = vst.msk [vmem:[%s452 + $0x10] sm:$0xf] %vm362, %v437
  %458 = vst.msk [vmem:[%s452 + $0x14] sm:$0xf] %vm362, %v439
  %459 = vst.msk [vmem:[%s452 + $0x18] sm:$0xf] %vm362, %v441
  %460 = vst.msk [vmem:[%s452 + $0x1c] sm:$0xf] %vm362, %v443
  %461 = vrot.lane.b32.xlu0 %v387, 32
  %v462 = vpop.permute.xlu0 %461
  %463 = vrot.lane.b32.xlu0 %v388, 32
  %v464 = vpop.permute.xlu0 %463
  %465 = vrot.lane.b32.xlu0 %v389, 32
  %v466 = vpop.permute.xlu0 %465
  %467 = vrot.lane.b32.xlu0 %v390, 32
  %v468 = vpop.permute.xlu0 %467
  %469 = vrot.lane.b32.xlu0 %v391, 32
  %v470 = vpop.permute.xlu0 %469
  %471 = vrot.lane.b32.xlu0 %v392, 32
  %v472 = vpop.permute.xlu0 %471
  %473 = vrot.lane.b32.xlu0 %v393, 32
  %v474 = vpop.permute.xlu0 %473
  %475 = vrot.lane.b32.xlu0 %v394, 32
  %v476 = vpop.permute.xlu0 %475
  %s485 = scalar_lea.vmem %s5, 96
  %486 = vst.msk [vmem:[%s485] sm:$0xf] %vm362, %v462
  %487 = vst.msk [vmem:[%s485 + $0x4] sm:$0xf] %vm362, %v464
  %488 = vst.msk [vmem:[%s485 + $0x8] sm:$0xf] %vm362, %v466
  %489 = vst.msk [vmem:[%s485 + $0xc] sm:$0xf] %vm362, %v468
  %490 = vst.msk [vmem:[%s485 + $0x10] sm:$0xf] %vm362, %v470
  %491 = vst.msk [vmem:[%s485 + $0x14] sm:$0xf] %vm362, %v472
  %492 = vst.msk [vmem:[%s485 + $0x18] sm:$0xf] %vm362, %v474
  %493 = vst.msk [vmem:[%s485 + $0x1c] sm:$0xf] %vm362, %v476
  %v494 = vpack.c.bf16 %v318, %v318
  %v495 = vpack.c.bf16 %v322, %v322
  %v496 = vpack.c.bf16 %v328, %v328
  %v497 = vpack.c.bf16 %v332, %v332
  %v498 = vpack.c.bf16 %v338, %v338
  %v499 = vpack.c.bf16 %v342, %v342
  %v500 = vpack.c.bf16 %v348, %v348
  %v501 = vpack.c.bf16 %v352, %v352
  %s502 = scalar_lea.vmem %s5, 128
  %503 = vst.msk [vmem:[%s502] sm:$0xf] %vm362, %v494
  %504 = vst.msk [vmem:[%s502 + $0x4] sm:$0xf] %vm362, %v495
  %505 = vst.msk [vmem:[%s502 + $0x8] sm:$0xf] %vm362, %v496
  %506 = vst.msk [vmem:[%s502 + $0xc] sm:$0xf] %vm362, %v497
  %507 = vst.msk [vmem:[%s502 + $0x10] sm:$0xf] %vm362, %v498
  %508 = vst.msk [vmem:[%s502 + $0x14] sm:$0xf] %vm362, %v499
  %509 = vst.msk [vmem:[%s502 + $0x18] sm:$0xf] %vm362, %v500
  %510 = vst.msk [vmem:[%s502 + $0x1c] sm:$0xf] %vm362, %v501
  %v519 = vunpack.c.l.b16 %v494
  %v520 = vunpack.c.l.b16 %v495
  %v521 = vunpack.c.l.b16 %v496
  %v522 = vunpack.c.l.b16 %v497
  %v523 = vunpack.c.l.b16 %v498
  %v524 = vunpack.c.l.b16 %v499
  %v525 = vunpack.c.l.b16 %v500
  %v526 = vunpack.c.l.b16 %v501
  %v527 = vpack.c.b16 %v519, %v519
  %v528 = vpack.c.b16 %v520, %v520
  %v529 = vpack.c.b16 %v521, %v521
  %v530 = vpack.c.b16 %v522, %v522
  %v531 = vpack.c.b16 %v523, %v523
  %v532 = vpack.c.b16 %v524, %v524
  %v533 = vpack.c.b16 %v525, %v525
  %v534 = vpack.c.b16 %v526, %v526
  %535 = vrot.lane.b32.xlu0 %v527, 96
  %v536 = vpop.permute.xlu0 %535
  %537 = vrot.lane.b32.xlu0 %v528, 96
  %v538 = vpop.permute.xlu0 %537
  %539 = vrot.lane.b32.xlu0 %v529, 96
  %v540 = vpop.permute.xlu0 %539
  %541 = vrot.lane.b32.xlu0 %v530, 96
  %v542 = vpop.permute.xlu0 %541
  %543 = vrot.lane.b32.xlu0 %v531, 96
  %v544 = vpop.permute.xlu0 %543
  %545 = vrot.lane.b32.xlu0 %v532, 96
  %v546 = vpop.permute.xlu0 %545
  %547 = vrot.lane.b32.xlu0 %v533, 96
  %v548 = vpop.permute.xlu0 %547
  %549 = vrot.lane.b32.xlu0 %v534, 96
  %v550 = vpop.permute.xlu0 %549
  %s559 = scalar_lea.vmem %s5, 160
  %560 = vst.msk [vmem:[%s559] sm:$0xf] %vm362, %v536
  %561 = vst.msk [vmem:[%s559 + $0x4] sm:$0xf] %vm362, %v538
  %562 = vst.msk [vmem:[%s559 + $0x8] sm:$0xf] %vm362, %v540
  %563 = vst.msk [vmem:[%s559 + $0xc] sm:$0xf] %vm362, %v542
  %564 = vst.msk [vmem:[%s559 + $0x10] sm:$0xf] %vm362, %v544
  %565 = vst.msk [vmem:[%s559 + $0x14] sm:$0xf] %vm362, %v546
  %566 = vst.msk [vmem:[%s559 + $0x18] sm:$0xf] %vm362, %v548
  %567 = vst.msk [vmem:[%s559 + $0x1c] sm:$0xf] %vm362, %v550
  // Predicated region
  $region22: #{bidirectional_gru_forward.2} parent=0 // pred_check
    _
  $region23: #{bidirectional_gru_forward.2} parent=0 // pred_check_branch
    %569 = sbr.rel (0) target = $region25
  $region24: #{bidirectional_gru_forward.2} parent=0 // pred_region
    _
  $region25: #{bidirectional_gru_forward.2} parent=0 // pred_fallthru
    _
  // Predicated region
  $region26: #{bidirectional_gru_forward.2} parent=0 // pred_check
    _
  $region27: #{bidirectional_gru_forward.2} parent=0 // pred_check_branch
    %571 = sbr.rel (0) target = $region29
  $region28: #{bidirectional_gru_forward.2} parent=0 // pred_region
    _
  $region29: #{bidirectional_gru_forward.2} parent=0 // pred_fallthru
    _

</llo_original>
